<compile_context>
chip_gen: v7x
topology: tpu7x:2x2x1
jax: 0.10.0
libtpu: 0.0.40
codegen_flags: <defaults>
</compile_context>

<pallas_src>
import functools

import jax
import jax.numpy as jnp
from jax import lax
from jax.experimental import pallas as pl
from jax.experimental.pallas import tpu as pltpu

# ------------------------- static problem sizes ---------------------------
FEAT_DIM = 32          # GFN(feat_dim)
HIDDEN = 64            # hidden size used throughout the module
N_TOTAL = 24           # rows of `feat` (= input_node_num + cand_edge_num)
INPUT_NODE_NUM = 16    # obs[9]  (j)
CAND_NODE_NUM = 12     # obs[8]  (i)
CAND_EDGE_NUM = 8      # obs[10]
OUT_LANES = 128        # lane width of packed slabs / output row

DATA_ROWS = N_TOTAL + INPUT_NODE_NUM   # 40: feat rows 0:24, g_adj rows 24:40
DATA_LANES = FEAT_DIM                  # 32
IDX_ROW_SUB = 8                        # dst_e / dst_t / dst_n rows (+ padding)

# weight-slab row ranges (all multiples of 8 -> tile-aligned static slices)
_W_NT1 = (0, 96)        # [agg_e|agg_t|feat] -> [NodeProfile_h | T_SAGE.conv1]
_W_T2M3 = (96, 352)     # [agg_n|x1|agg_g|hr] -> [conv2_x2 | gnn3_y3]
_W_MH = (352, 416)      # y_mean -> [Manager.lin z | Manager.value]
_W_PHI = (416, 448)     # cand_edge_feat -> phi
_W_FW1V = (448, 704)    # U -> [fw1 hidden | Worker.value lane]
_W_FW2 = (704, 768)
_W_FW3 = (768, 832)
W_ROWS = 832
B_ROWS = 16


# ------------------------------ fused kernel -------------------------------
def _gfn_kernel(training, data_ref, cols_ref, rows_ref, w_ref, b_ref, *rest):
    if training:
        drop_ref, out_ref = rest
    else:
        (out_ref,) = rest
    f32 = jnp.float32

    def mm(a, b):
        return jnp.dot(a, b, preferred_element_type=f32)

    data = data_ref[...]                                   # [40, 32]
    feat = data[0:N_TOTAL, :]                              # [24, 32]
    g_adj = data[N_TOTAL:DATA_ROWS, 0:INPUT_NODE_NUM]      # [16, 16]

    cols = cols_ref[...]                                   # [E, 4] i32
    rows = rows_ref[...]                                   # [8, E] i32
    epad = cols.shape[0]
    biases = b_ref[...]                                    # [16, 128]

    def gather_mat(idx_col, n):
        # [E,1] src indices -> [E,n] one-hot (padding index -1 -> zero row)
        return (lax.broadcasted_iota(jnp.int32, (idx_col.shape[0], n), 1)
                == idx_col).astype(f32)

    def scatter_mat(idx_row, n):
        # [1,E] dst indices -> row-normalized [n,E] scatter-mean matrix
        # (degree normalization folded in once; exact divide, deg is small).
        d = (lax.broadcasted_iota(jnp.int32, (n, idx_row.shape[1]), 0)
             == idx_row).astype(f32)
        deg = jnp.maximum(jnp.sum(d, axis=1, keepdims=True), 1.0)
        return d * (1.0 / deg)

    # --- stage 1: NodeProfile SAGE + T_SAGE.conv1 (one merged MXU matmul) ---
    s_et = gather_mat(cols[:, 0:1], N_TOTAL)               # [E, 24] (e then t)
    gath_et = mm(s_et, feat)                               # [E, 32]
    d_e = scatter_mat(rows[0:1, :], N_TOTAL)               # [24, E]
    d_t = scatter_mat(rows[1:2, :], N_TOTAL)               # [24, E]
    agg_e = mm(d_e, gath_et)                               # [24, 32]
    agg_t = mm(d_t, gath_et)                               # [24, 32]
    lhs1 = jnp.concatenate([agg_e, agg_t, feat], axis=1)   # [24, 96]
    y01 = mm(lhs1, w_ref[_W_NT1[0]:_W_NT1[1], :]) + biases[0:1, :]   # [24,128]
    h = y01[0:INPUT_NODE_NUM, 0:HIDDEN]                    # [16, 64]
    x1 = jnp.maximum(y01[0:INPUT_NODE_NUM, HIDDEN:], 0.0)  # [16, 64]
    if training:
        x1 = x1 * drop_ref[...]

    # --- stage 2: T_SAGE.conv2 + Manager gnn3 (one block-diag matmul) -------
    s_n = gather_mat(cols[:, 1:2], INPUT_NODE_NUM)         # [E, 16]
    gath_n = mm(s_n, x1)                                   # [E, 64]
    d_n = scatter_mat(rows[2:3, :], INPUT_NODE_NUM)        # [16, E]
    agg_n = mm(d_n, gath_n)                                # [16, 64]

    hr = jnp.maximum(h, 0.0)                               # h.relu()
    deg_g = jnp.maximum(jnp.sum(g_adj, axis=1, keepdims=True), 1.0)
    agg_g = mm(g_adj * (1.0 / deg_g), hr)                  # [16, 64]

    lhs2 = jnp.concatenate([agg_n, x1, agg_g, hr], axis=1)              # [16,256]
    st2 = mm(lhs2, w_ref[_W_T2M3[0]:_W_T2M3[1], :]) + biases[1:2, :]    # [16,128]
    x2 = st2[:, 0:HIDDEN]                                  # conv2 out (rows >=
    y3 = jnp.maximum(st2[:, HIDDEN:], 0.0)                 # cand_node_num unused)

    # BatchNorm1d with batch statistics (nn.Module default train() state).
    # TODO(synk): running-mean/var eval-mode BN semantics not implemented.
    mu = jnp.mean(y3, axis=0, keepdims=True)
    var = jnp.mean((y3 - mu) ** 2, axis=0, keepdims=True)
    y3 = ((y3 - mu) * lax.rsqrt(var + 1e-5) * biases[2:3, 0:HIDDEN]
          + biases[3:4, 0:HIDDEN])

    # Manager heads: lin and value_function share LHS -> one matmul.
    y_mean = jnp.mean(y3, axis=0, keepdims=True)                         # [1,64]
    zy = mm(y_mean, w_ref[_W_MH[0]:_W_MH[1], :]) + biases[4:5, :]        # [1,128]
    z = zy[:, 0:HIDDEN]
    value_m = zy[:, HIDDEN:HIDDEN + 1]

    # --- u_1 = cat(relu(x_2), F.normalize(x_2 * z, dim=1)) ------------------
    xz = x2 * z
    inv = lax.rsqrt(jnp.maximum(jnp.sum(xz * xz, axis=1, keepdims=True), 1e-24))
    u1 = jnp.concatenate([jnp.maximum(x2, 0.0), xz * inv], axis=1)       # [16,128]

    # --- Worker --------------------------------------------------------------
    cef = feat[INPUT_NODE_NUM:INPUT_NODE_NUM + CAND_EDGE_NUM, :]         # [8,32]
    emb = (mm(cef, w_ref[_W_PHI[0]:_W_PHI[1], :]) + biases[5:6, :])[:, 0:HIDDEN]

    nidx = cols[0:CAND_EDGE_NUM, 2:3]                                    # [8,1]
    eidx = cols[0:CAND_EDGE_NUM, 3:4]                                    # [8,1]
    sel_n = gather_mat(nidx, INPUT_NODE_NUM)                             # [8,16]
    sel_e = gather_mat(eidx, CAND_EDGE_NUM)                              # [8,8]
    a_e = mm(sel_e, emb)                                                 # [8,64]
    hu = mm(sel_n, jnp.concatenate([h, u1], axis=1))                     # [8,192]
    h_g = hu[:, 0:HIDDEN]
    u_g = hu[:, HIDDEN:]

    # a_h = F.normalize(a_e * h[node], dim=0): per-row 64-vector normalize.
    ah = a_e * h_g
    inv2 = lax.rsqrt(jnp.maximum(jnp.sum(ah * ah, axis=1, keepdims=True), 1e-24))
    U = jnp.concatenate([jnp.maximum(a_e, 0.0), ah * inv2, u_g], axis=1)  # [8,256]

    # fw1 and Worker.value_function share LHS U (value = mean of extra lane).
    y1 = mm(U, w_ref[_W_FW1V[0]:_W_FW1V[1], :])                          # [8,128]
    hdn = jnp.maximum(y1[:, 0:HIDDEN] + biases[6:7, 0:HIDDEN], 0.0)
    value_w = (jnp.mean(y1[:, HIDDEN:HIDDEN + 1], axis=0, keepdims=True)
               + biases[6:7, HIDDEN:HIDDEN + 1])                         # [1,1]
    hdn = jnp.maximum(
        mm(hdn, w_ref[_W_FW2[0]:_W_FW2[1], :])[:, 0:HIDDEN]
        + biases[7:8, 0:HIDDEN], 0.0)
    s_col = (mm(hdn, w_ref[_W_FW3[0]:_W_FW3[1], :])[:, 0:1]
             + biases[8:9, 0:1])                                         # [8,1]

    # --- pack [value_W | value_M | a_values(e) | 0 ...] into one lane-dense row
    lane8 = lax.broadcasted_iota(jnp.int32, (CAND_EDGE_NUM, OUT_LANES), 1)
    sub8 = lax.broadcasted_iota(jnp.int32, (CAND_EDGE_NUM, OUT_LANES), 0)
    a_placed = jnp.sum(s_col * (lane8 == sub8 + 2).astype(f32),
                       axis=0, keepdims=True)                            # [1,128]
    lane1 = lax.broadcasted_iota(jnp.int32, (1, OUT_LANES), 1)
    row = (a_placed + value_w * (lane1 == 0).astype(f32)
           + value_m * (lane1 == 1).astype(f32))
    out_ref[...] = jnp.broadcast_to(row, (8, OUT_LANES))


# --------------------------- parameter setup -------------------------------
def init_params(key):
    keys = iter(jax.random.split(key, 64))

    def lin(fan_in, fan_out, bias=True):
        lim = 1.0 / (fan_in ** 0.5)
        w = jax.random.uniform(next(keys), (fan_in, fan_out), jnp.float32, -lim, lim)
        b = (jax.random.uniform(next(keys), (1, fan_out), jnp.float32, -lim, lim)
             if bias else jnp.zeros((1, fan_out), jnp.float32))
        return w, b

    p = {}
    # NodeProfile.conv = SAGEConv(FEAT_DIM, 64): lin_l (bias) on agg, lin_r on root
    p["node_wl"], p["node_b"] = lin(FEAT_DIM, HIDDEN)
    p["node_wr"], _ = lin(FEAT_DIM, HIDDEN, bias=False)
    # T_SAGE.conv1 / conv2
    p["t1_wl"], p["t1_b"] = lin(FEAT_DIM, HIDDEN)
    p["t1_wr"], _ = lin(FEAT_DIM, HIDDEN, bias=False)
    p["t2_wl"], p["t2_b"] = lin(HIDDEN, HIDDEN)
    p["t2_wr"], _ = lin(HIDDEN, HIDDEN, bias=False)
    # Manager.gnn3_embed = G_SAGE(64, 64, 64, lin=False): DenseSAGEConv + BN
    p["m3_wl"], p["m3_b"] = lin(HIDDEN, HIDDEN)
    p["m3_wr"], _ = lin(HIDDEN, HIDDEN, bias=False)
    p["m3_bn_g"] = jnp.ones((1, HIDDEN), jnp.float32)
    p["m3_bn_b"] = jnp.zeros((1, HIDDEN), jnp.float32)
    # Manager.lin (64 -> 64) and value_function (64 -> 1)
    p["m_lin_w"], p["m_lin_b"] = lin(HIDDEN, HIDDEN)
    p["m_val_w"], p["m_val_b"] = lin(HIDDEN, 1)
    # Worker
    p["phi_w"], p["phi_b"] = lin(FEAT_DIM, HIDDEN)
    p["fw1_w"], p["fw1_b"] = lin(4 * HIDDEN, HIDDEN)
    p["fw2_w"], p["fw2_b"] = lin(HIDDEN, HIDDEN)
    p["fw3_w"], p["fw3_b"] = lin(HIDDEN, 1)
    p["w_val_w"], p["w_val_b"] = lin(4 * HIDDEN, 1)
    # NOTE: Manager.gnn{1,2}_{pool,embed} exist in __init__ but are unused for
    # graphs with < 25 nodes (the branch these shapes exercise).
    return p


def pack_params(p):
    """Pack every weight/bias into two contiguous slabs (done once, off-line)."""
    f32 = jnp.float32

    def z(r, c):
        return jnp.zeros((r, c), f32)

    def pad_lanes(x):
        return jnp.pad(x, ((0, 0), (0, OUT_LANES - x.shape[1])))

    w_nt1 = jnp.concatenate([
        jnp.concatenate([p["node_wl"], z(FEAT_DIM, HIDDEN)], 1),   # agg_e rows
        jnp.concatenate([z(FEAT_DIM, HIDDEN), p["t1_wl"]], 1),     # agg_t rows
        jnp.concatenate([p["node_wr"], p["t1_wr"]], 1),            # feat  rows
    ], 0)                                                          # [96, 128]
    w_t2m3 = jnp.concatenate([
        jnp.concatenate([p["t2_wl"], z(HIDDEN, HIDDEN)], 1),       # agg_n rows
        jnp.concatenate([p["t2_wr"], z(HIDDEN, HIDDEN)], 1),       # x1    rows
        jnp.concatenate([z(HIDDEN, HIDDEN), p["m3_wl"]], 1),       # agg_g rows
        jnp.concatenate([z(HIDDEN, HIDDEN), p["m3_wr"]], 1),       # hr    rows
    ], 0)                                                          # [256, 128]
    w_mh = pad_lanes(jnp.concatenate([p["m_lin_w"], p["m_val_w"]], 1))   # [64,128]
    w_phi = pad_lanes(p["phi_w"])                                        # [32,128]
    w_fw1v = pad_lanes(jnp.concatenate([p["fw1_w"], p["w_val_w"]], 1))   # [256,128]
    w_fw2 = pad_lanes(p["fw2_w"])                                        # [64,128]
    w_fw3 = pad_lanes(p["fw3_w"])                                        # [64,128]
    w_slab = jnp.concatenate(
        [w_nt1, w_t2m3, w_mh, w_phi, w_fw1v, w_fw2, w_fw3], 0)
    assert w_slab.shape == (W_ROWS, OUT_LANES)

    rows = [
        jnp.concatenate([p["node_b"], p["t1_b"]], 1),                    # 0
        jnp.concatenate([p["t2_b"], p["m3_b"]], 1),                      # 1
        pad_lanes(p["m3_bn_g"]),                                         # 2
        pad_lanes(p["m3_bn_b"]),                                         # 3
        pad_lanes(jnp.concatenate([p["m_lin_b"], p["m_val_b"]], 1)),     # 4
        pad_lanes(p["phi_b"]),                                           # 5
        pad_lanes(jnp.concatenate([p["fw1_b"], p["w_val_b"]], 1)),       # 6
        pad_lanes(p["fw2_b"]),                                           # 7
        pad_lanes(p["fw3_b"]),                                           # 8
    ]
    b_slab = jnp.concatenate(
        rows + [jnp.zeros((B_ROWS - len(rows), OUT_LANES), f32)], 0)
    assert b_slab.shape == (B_ROWS, OUT_LANES)
    return w_slab, b_slab


# --------------------------- host-side index packing ------------------------
def _pack_indices(e_adj, t_adj, n_adj, c_adj):
    """Pack all edge/candidate indices into two small int32 arrays.

    idx_cols[b, :, 0] = src of e-edges then t-edges    (gather one-hots)
    idx_cols[b, :, 1] = src of n-edges
    idx_cols[b, :, 2] = candidate node index, [:, 3] = candidate edge offset
    idx_rows[b, 0/1/2, :] = dst of e / t / n edges     (scatter one-hots)
    Padding entries are -1 (never match an iota -> contribute nothing).
    """
    B = e_adj.shape[0]
    e_e, e_t, e_n = e_adj.shape[2], t_adj.shape[2], n_adj.shape[2]
    epad = max(e_e + e_t, e_n, CAND_EDGE_NUM)
    epad = ((epad + 7) // 8) * 8

    def place(vals, offset):
        k = vals.shape[1]
        return jnp.concatenate(
            [-jnp.ones((B, offset), jnp.int32),
             vals.astype(jnp.int32),
             -jnp.ones((B, epad - offset - k), jnp.int32)], axis=1)

    src_et = place(jnp.concatenate([e_adj[:, 0, :], t_adj[:, 0, :]], axis=1), 0)
    src_n = place(n_adj[:, 0, :], 0)
    nidx = place(c_adj[:, 0, :], 0)
    eidx = place(c_adj[:, 1, :] - INPUT_NODE_NUM, 0)
    idx_cols = jnp.stack([src_et, src_n, nidx, eidx], axis=2)     # [B, epad, 4]

    neg = -jnp.ones((B, epad), jnp.int32)
    dst_e = place(e_adj[:, 1, :], 0)
    dst_t = place(t_adj[:, 1, :], e_e)
    dst_n = place(n_adj[:, 1, :], 0)
    idx_rows = jnp.stack(
        [dst_e, dst_t, dst_n] + [neg] * (IDX_ROW_SUB - 3), axis=1)  # [B, 8, epad]
    return idx_cols, idx_rows


# ------------------------------ forward ------------------------------------
def gfn_forward(w_slab, b_slab, feat, e_adj, t_adj, n_adj, g_adj, c_adj,
                training=False, rng=None):
    """Batched GFN forward.  Leading dim B = number of independent observations."""
    B = feat.shape[0]
    feat = feat.astype(jnp.float32)
    g_pad = jnp.pad(g_adj.astype(jnp.float32),
                    ((0, 0), (0, 0), (0, DATA_LANES - INPUT_NODE_NUM)))
    data = jnp.concatenate([feat, g_pad], axis=1)                 # [B, 40, 32]
    idx_cols, idx_rows = _pack_indices(e_adj, t_adj, n_adj, c_adj)
    epad = idx_cols.shape[1]

    operands = [data, idx_cols, idx_rows, w_slab, b_slab]
    in_specs = [
        pl.BlockSpec((None, DATA_ROWS, DATA_LANES), lambda b: (b, 0, 0)),
        pl.BlockSpec((None, epad, 4), lambda b: (b, 0, 0)),
        pl.BlockSpec((None, IDX_ROW_SUB, epad), lambda b: (b, 0, 0)),
        pl.BlockSpec((W_ROWS, OUT_LANES), lambda b: (0, 0)),   # weights resident
        pl.BlockSpec((B_ROWS, OUT_LANES), lambda b: (0, 0)),   # biases resident
    ]
    if training:
        # TODO(synk): torch's F.dropout RNG stream cannot be reproduced bit-exactly.
        drop = (jax.random.bernoulli(rng, 0.5, (B, INPUT_NODE_NUM, HIDDEN))
                .astype(jnp.float32) * 2.0)
        operands.append(drop)
        in_specs.append(
            pl.BlockSpec((None, INPUT_NODE_NUM, HIDDEN), lambda b: (b, 0, 0)))

    out = pl.pallas_call(
        functools.partial(_gfn_kernel, training),
        grid=(B,),
        out_shape=jax.ShapeDtypeStruct((B, 8, OUT_LANES), jnp.float32),
        in_specs=in_specs,
        out_specs=pl.BlockSpec((None, 8, OUT_LANES), lambda b: (b, 0, 0)),
        compiler_params=pltpu.CompilerParams(
            dimension_semantics=("parallel",)),
    )(*operands)

    value_W = out[:, 0:1, 0:1]                      # [B, 1, 1]
    value_M = out[:, 0:1, 1:2]                      # [B, 1, 1]
    a_values = out[:, 0:1, 2:2 + CAND_EDGE_NUM]     # [B, 1, E]
    # link_loss + ent_loss == 0 for the <25-node Manager branch exercised here.
    # TODO(synk): the >=25 / >=100 dense_diff_pool Manager branches are not
    # exercised at these shapes and are not implemented.
    tran_grad = jnp.zeros((B,), jnp.float32)
    return value_W, value_M, a_values, tran_grad


# -------------------------------- main --------------------------------------
if __name__ == "__main__":
    B = 2
    key = jax.random.PRNGKey(0)
    kp, kf, k1, k2, k3, k4, k5 = jax.random.split(key, 7)

    w_slab, b_slab = pack_params(init_params(kp))

    feat = jax.random.normal(kf, (B, N_TOTAL, FEAT_DIM), jnp.float32)       # obs[0]
    e_adj = jax.random.randint(k1, (B, 2, 40), 0, N_TOTAL, jnp.int32)       # obs[2]
    t_adj = jax.random.randint(k2, (B, 2, 40), 0, N_TOTAL, jnp.int32)       # obs[3]
    n_adj = jax.random.randint(k3, (B, 2, 30), 0, INPUT_NODE_NUM, jnp.int32)  # obs[4]
    g_adj = jax.random.bernoulli(
        k4, 0.3, (B, INPUT_NODE_NUM, INPUT_NODE_NUM)).astype(jnp.float32)   # obs[5]
    c_node = jax.random.randint(k5, (B, CAND_EDGE_NUM), 0, CAND_NODE_NUM, jnp.int32)
    c_edge = jnp.broadcast_to(
        jnp.arange(INPUT_NODE_NUM, INPUT_NODE_NUM + CAND_EDGE_NUM, dtype=jnp.int32),
        (B, CAND_EDGE_NUM))
    c_adj = jnp.stack([c_node, c_edge], axis=1)                             # obs[6]

    fwd = jax.jit(functools.partial(gfn_forward, training=False))
    value_W, value_M, a_values, tran_grad = fwd(
        w_slab, b_slab, feat, e_adj, t_adj, n_adj, g_adj, c_adj)
    jax.block_until_ready((value_W, value_M, a_values, tran_grad))

    assert value_W.shape == (B, 1, 1)
    assert value_M.shape == (B, 1, 1)
    assert a_values.shape == (B, 1, CAND_EDGE_NUM)
    assert tran_grad.shape == (B,)
    assert bool(jnp.all(jnp.isfinite(value_W)))
    assert bool(jnp.all(jnp.isfinite(value_M)))
    assert bool(jnp.all(jnp.isfinite(a_values)))

    print("KERNEL_OK")
</pallas_src>

<mosaic_0001>
module attributes {stable_mosaic.version = 11 : i64} {
  func.func @_gfn_kernel(%arg0: i32, %arg1: memref<1x40x32xf32, #tpu.memory_space<vmem>>, %arg2: memref<1x80x4xi32, #tpu.memory_space<vmem>>, %arg3: memref<1x8x80xi32, #tpu.memory_space<vmem>>, %arg4: memref<832x128xf32, #tpu.memory_space<vmem>>, %arg5: memref<16x128xf32, #tpu.memory_space<vmem>>, %arg6: memref<1x8x128xf32, #tpu.memory_space<vmem>>) attributes {dimension_semantics = [#tpu.dimension_semantics<parallel>], iteration_bounds = array<i64: 2>, scalar_prefetch = 0 : i64, scratch_operands = 0 : i64, tpu.core_type = #tpu.core_type<tc>, window_params = [{transform_indices = @transform_0, window_bounds = array<i64: 1, 40, 32>}, {transform_indices = @transform_1, window_bounds = array<i64: 1, 80, 4>}, {transform_indices = @transform_2, window_bounds = array<i64: 1, 8, 80>}, {pipeline_mode = #tpu.pipeline_mode<synchronous>, transform_indices = @transform_3, window_bounds = array<i64: 832, 128>}, {pipeline_mode = #tpu.pipeline_mode<synchronous>, transform_indices = @transform_4, window_bounds = array<i64: 16, 128>}, {transform_indices = @transform_5, window_bounds = array<i64: 1, 8, 128>}]} {
    %c0 = arith.constant 0 : index
    %c0_0 = arith.constant 0 : index
    %c0_1 = arith.constant 0 : index
    %0 = vector.load %arg1[%c0, %c0_0, %c0_1] : memref<1x40x32xf32, #tpu.memory_space<vmem>>, vector<1x40x32xf32>
    %1 = vector.shape_cast %0 : vector<1x40x32xf32> to vector<40x32xf32>
    %2 = vector.extract_strided_slice %1 {offsets = [0, 0], sizes = [24, 32], strides = [1, 1]} : vector<40x32xf32> to vector<24x32xf32>
    %3 = vector.extract_strided_slice %1 {offsets = [24, 0], sizes = [16, 16], strides = [1, 1]} : vector<40x32xf32> to vector<16x16xf32>
    %c0_2 = arith.constant 0 : index
    %c0_3 = arith.constant 0 : index
    %c0_4 = arith.constant 0 : index
    %4 = vector.load %arg2[%c0_2, %c0_3, %c0_4] : memref<1x80x4xi32, #tpu.memory_space<vmem>>, vector<1x80x4xi32>
    %5 = vector.shape_cast %4 : vector<1x80x4xi32> to vector<80x4xi32>
    %c0_5 = arith.constant 0 : index
    %c0_6 = arith.constant 0 : index
    %c0_7 = arith.constant 0 : index
    %6 = vector.load %arg3[%c0_5, %c0_6, %c0_7] : memref<1x8x80xi32, #tpu.memory_space<vmem>>, vector<1x8x80xi32>
    %7 = vector.shape_cast %6 : vector<1x8x80xi32> to vector<8x80xi32>
    %c0_8 = arith.constant 0 : index
    %c0_9 = arith.constant 0 : index
    %8 = vector.load %arg5[%c0_8, %c0_9] : memref<16x128xf32, #tpu.memory_space<vmem>>, vector<16x128xf32>
    %9 = vector.extract_strided_slice %5 {offsets = [0, 0], sizes = [80, 1], strides = [1, 1]} : vector<80x4xi32> to vector<80x1xi32>
    %10 = tpu.iota {dimensions = array<i32: 1>} : vector<80x24xi32>
    %11 = vector.broadcast %9 : vector<80x1xi32> to vector<80x24xi32>
    %12 = arith.cmpi eq, %10, %11 : vector<80x24xi32>
    %13 = arith.extui %12 : vector<80x24xi1> to vector<80x24xi32>
    %14 = arith.sitofp %13 : vector<80x24xi32> to vector<80x24xf32>
    %cst = arith.constant dense<0.000000e+00> : vector<80x32xf32>
    %15 = tpu.matmul %14, %2, %cst {dimension_numbers = #tpu.dot_dimension_numbers<[1], [0], [0], [1], [0, 0, 1, 1], [], []>} : vector<80x24xf32>, vector<24x32xf32>, vector<80x32xf32> -> vector<80x32xf32>
    %16 = vector.extract_strided_slice %7 {offsets = [0, 0], sizes = [1, 80], strides = [1, 1]} : vector<8x80xi32> to vector<1x80xi32>
    %17 = tpu.iota {dimensions = array<i32: 0>} : vector<24x80xi32>
    %18 = vector.broadcast %16 : vector<1x80xi32> to vector<24x80xi32>
    %19 = arith.cmpi eq, %17, %18 : vector<24x80xi32>
    %20 = arith.extui %19 : vector<24x80xi1> to vector<24x80xi32>
    %21 = arith.sitofp %20 : vector<24x80xi32> to vector<24x80xf32>
    %cst_10 = arith.constant dense<0.000000e+00> : vector<24xf32>
    %22 = vector.multi_reduction <add>, %21, %cst_10 [1] : vector<24x80xf32> to vector<24xf32>
    %23 = vector.shape_cast %22 : vector<24xf32> to vector<24x1xf32>
    %cst_11 = arith.constant 1.000000e+00 : f32
    %24 = vector.broadcast %cst_11 : f32 to vector<24x1xf32>
    %25 = arith.maximumf %23, %24 : vector<24x1xf32>
    %cst_12 = arith.constant 1.000000e+00 : f32
    %26 = vector.broadcast %cst_12 : f32 to vector<24x1xf32>
    %27 = arith.divf %26, %25 : vector<24x1xf32>
    %28 = vector.broadcast %27 : vector<24x1xf32> to vector<24x80xf32>
    %29 = arith.mulf %21, %28 : vector<24x80xf32>
    %30 = vector.extract_strided_slice %7 {offsets = [1, 0], sizes = [1, 80], strides = [1, 1]} : vector<8x80xi32> to vector<1x80xi32>
    %31 = tpu.iota {dimensions = array<i32: 0>} : vector<24x80xi32>
    %32 = vector.broadcast %30 : vector<1x80xi32> to vector<24x80xi32>
    %33 = arith.cmpi eq, %31, %32 : vector<24x80xi32>
    %34 = arith.extui %33 : vector<24x80xi1> to vector<24x80xi32>
    %35 = arith.sitofp %34 : vector<24x80xi32> to vector<24x80xf32>
    %cst_13 = arith.constant dense<0.000000e+00> : vector<24xf32>
    %36 = vector.multi_reduction <add>, %35, %cst_13 [1] : vector<24x80xf32> to vector<24xf32>
    %37 = vector.shape_cast %36 : vector<24xf32> to vector<24x1xf32>
    %cst_14 = arith.constant 1.000000e+00 : f32
    %38 = vector.broadcast %cst_14 : f32 to vector<24x1xf32>
    %39 = arith.maximumf %37, %38 : vector<24x1xf32>
    %cst_15 = arith.constant 1.000000e+00 : f32
    %40 = vector.broadcast %cst_15 : f32 to vector<24x1xf32>
    %41 = arith.divf %40, %39 : vector<24x1xf32>
    %42 = vector.broadcast %41 : vector<24x1xf32> to vector<24x80xf32>
    %43 = arith.mulf %35, %42 : vector<24x80xf32>
    %cst_16 = arith.constant dense<0.000000e+00> : vector<24x32xf32>
    %44 = tpu.matmul %29, %15, %cst_16 {dimension_numbers = #tpu.dot_dimension_numbers<[1], [0], [0], [1], [0, 0, 1, 1], [], []>} : vector<24x80xf32>, vector<80x32xf32>, vector<24x32xf32> -> vector<24x32xf32>
    %cst_17 = arith.constant dense<0.000000e+00> : vector<24x32xf32>
    %45 = tpu.matmul %43, %15, %cst_17 {dimension_numbers = #tpu.dot_dimension_numbers<[1], [0], [0], [1], [0, 0, 1, 1], [], []>} : vector<24x80xf32>, vector<80x32xf32>, vector<24x32xf32> -> vector<24x32xf32>
    %46 = tpu.concatenate %44, %45, %2 in 1 : vector<24x32xf32>, vector<24x32xf32>, vector<24x32xf32> -> vector<24x96xf32>
    %c0_18 = arith.constant 0 : index
    %c0_19 = arith.constant 0 : index
    %47 = vector.load %arg4[%c0_18, %c0_19] : memref<832x128xf32, #tpu.memory_space<vmem>>, vector<96x128xf32>
    %cst_20 = arith.constant dense<0.000000e+00> : vector<24x128xf32>
    %48 = tpu.matmul %46, %47, %cst_20 {dimension_numbers = #tpu.dot_dimension_numbers<[1], [0], [0], [1], [0, 0, 1, 1], [], []>} : vector<24x96xf32>, vector<96x128xf32>, vector<24x128xf32> -> vector<24x128xf32>
    %49 = vector.extract_strided_slice %8 {offsets = [0, 0], sizes = [1, 128], strides = [1, 1]} : vector<16x128xf32> to vector<1x128xf32>
    %50 = vector.broadcast %49 : vector<1x128xf32> to vector<24x128xf32>
    %51 = arith.addf %48, %50 : vector<24x128xf32>
    %52 = vector.extract_strided_slice %51 {offsets = [0, 0], sizes = [16, 64], strides = [1, 1]} : vector<24x128xf32> to vector<16x64xf32>
    %53 = vector.extract_strided_slice %51 {offsets = [0, 64], sizes = [16, 64], strides = [1, 1]} : vector<24x128xf32> to vector<16x64xf32>
    %cst_21 = arith.constant 0.000000e+00 : f32
    %54 = vector.broadcast %cst_21 : f32 to vector<16x64xf32>
    %55 = arith.maximumf %53, %54 : vector<16x64xf32>
    %56 = vector.extract_strided_slice %5 {offsets = [0, 1], sizes = [80, 1], strides = [1, 1]} : vector<80x4xi32> to vector<80x1xi32>
    %57 = tpu.iota {dimensions = array<i32: 1>} : vector<80x16xi32>
    %58 = vector.broadcast %56 : vector<80x1xi32> to vector<80x16xi32>
    %59 = arith.cmpi eq, %57, %58 : vector<80x16xi32>
    %60 = arith.extui %59 : vector<80x16xi1> to vector<80x16xi32>
    %61 = arith.sitofp %60 : vector<80x16xi32> to vector<80x16xf32>
    %cst_22 = arith.constant dense<0.000000e+00> : vector<80x64xf32>
    %62 = tpu.matmul %61, %55, %cst_22 {dimension_numbers = #tpu.dot_dimension_numbers<[1], [0], [0], [1], [0, 0, 1, 1], [], []>} : vector<80x16xf32>, vector<16x64xf32>, vector<80x64xf32> -> vector<80x64xf32>
    %63 = vector.extract_strided_slice %7 {offsets = [2, 0], sizes = [1, 80], strides = [1, 1]} : vector<8x80xi32> to vector<1x80xi32>
    %64 = tpu.iota {dimensions = array<i32: 0>} : vector<16x80xi32>
    %65 = vector.broadcast %63 : vector<1x80xi32> to vector<16x80xi32>
    %66 = arith.cmpi eq, %64, %65 : vector<16x80xi32>
    %67 = arith.extui %66 : vector<16x80xi1> to vector<16x80xi32>
    %68 = arith.sitofp %67 : vector<16x80xi32> to vector<16x80xf32>
    %cst_23 = arith.constant dense<0.000000e+00> : vector<16xf32>
    %69 = vector.multi_reduction <add>, %68, %cst_23 [1] : vector<16x80xf32> to vector<16xf32>
    %70 = vector.shape_cast %69 : vector<16xf32> to vector<16x1xf32>
    %cst_24 = arith.constant 1.000000e+00 : f32
    %71 = vector.broadcast %cst_24 : f32 to vector<16x1xf32>
    %72 = arith.maximumf %70, %71 : vector<16x1xf32>
    %cst_25 = arith.constant 1.000000e+00 : f32
    %73 = vector.broadcast %cst_25 : f32 to vector<16x1xf32>
    %74 = arith.divf %73, %72 : vector<16x1xf32>
    %75 = vector.broadcast %74 : vector<16x1xf32> to vector<16x80xf32>
    %76 = arith.mulf %68, %75 : vector<16x80xf32>
    %cst_26 = arith.constant dense<0.000000e+00> : vector<16x64xf32>
    %77 = tpu.matmul %76, %62, %cst_26 {dimension_numbers = #tpu.dot_dimension_numbers<[1], [0], [0], [1], [0, 0, 1, 1], [], []>} : vector<16x80xf32>, vector<80x64xf32>, vector<16x64xf32> -> vector<16x64xf32>
    %cst_27 = arith.constant 0.000000e+00 : f32
    %78 = vector.broadcast %cst_27 : f32 to vector<16x64xf32>
    %79 = arith.maximumf %52, %78 : vector<16x64xf32>
    %cst_28 = arith.constant dense<0.000000e+00> : vector<16xf32>
    %80 = vector.multi_reduction <add>, %3, %cst_28 [1] : vector<16x16xf32> to vector<16xf32>
    %81 = vector.shape_cast %80 : vector<16xf32> to vector<16x1xf32>
    %cst_29 = arith.constant 1.000000e+00 : f32
    %82 = vector.broadcast %cst_29 : f32 to vector<16x1xf32>
    %83 = arith.maximumf %81, %82 : vector<16x1xf32>
    %cst_30 = arith.constant 1.000000e+00 : f32
    %84 = vector.broadcast %cst_30 : f32 to vector<16x1xf32>
    %85 = arith.divf %84, %83 : vector<16x1xf32>
    %86 = vector.broadcast %85 : vector<16x1xf32> to vector<16x16xf32>
    %87 = arith.mulf %3, %86 : vector<16x16xf32>
    %cst_31 = arith.constant dense<0.000000e+00> : vector<16x64xf32>
    %88 = tpu.matmul %87, %79, %cst_31 {dimension_numbers = #tpu.dot_dimension_numbers<[1], [0], [0], [1], [0, 0, 1, 1], [], []>} : vector<16x16xf32>, vector<16x64xf32>, vector<16x64xf32> -> vector<16x64xf32>
    %89 = tpu.concatenate %77, %55, %88, %79 in 1 : vector<16x64xf32>, vector<16x64xf32>, vector<16x64xf32>, vector<16x64xf32> -> vector<16x256xf32>
    %c96 = arith.constant 96 : index
    %c0_32 = arith.constant 0 : index
    %90 = vector.load %arg4[%c96, %c0_32] : memref<832x128xf32, #tpu.memory_space<vmem>>, vector<256x128xf32>
    %cst_33 = arith.constant dense<0.000000e+00> : vector<16x128xf32>
    %91 = tpu.matmul %89, %90, %cst_33 {dimension_numbers = #tpu.dot_dimension_numbers<[1], [0], [0], [1], [0, 0, 1, 1], [], []>} : vector<16x256xf32>, vector<256x128xf32>, vector<16x128xf32> -> vector<16x128xf32>
    %92 = vector.extract_strided_slice %8 {offsets = [1, 0], sizes = [1, 128], strides = [1, 1]} : vector<16x128xf32> to vector<1x128xf32>
    %93 = vector.broadcast %92 : vector<1x128xf32> to vector<16x128xf32>
    %94 = arith.addf %91, %93 : vector<16x128xf32>
    %95 = vector.extract_strided_slice %94 {offsets = [0, 0], sizes = [16, 64], strides = [1, 1]} : vector<16x128xf32> to vector<16x64xf32>
    %96 = vector.extract_strided_slice %94 {offsets = [0, 64], sizes = [16, 64], strides = [1, 1]} : vector<16x128xf32> to vector<16x64xf32>
    %cst_34 = arith.constant 0.000000e+00 : f32
    %97 = vector.broadcast %cst_34 : f32 to vector<16x64xf32>
    %98 = arith.maximumf %96, %97 : vector<16x64xf32>
    %cst_35 = arith.constant dense<0.000000e+00> : vector<64xf32>
    %99 = vector.multi_reduction <add>, %98, %cst_35 [0] : vector<16x64xf32> to vector<64xf32>
    %100 = vector.shape_cast %99 : vector<64xf32> to vector<1x64xf32>
    %cst_36 = arith.constant 1.600000e+01 : f32
    %101 = vector.broadcast %cst_36 : f32 to vector<1x64xf32>
    %102 = arith.divf %100, %101 : vector<1x64xf32>
    %103 = vector.broadcast %102 : vector<1x64xf32> to vector<16x64xf32>
    %104 = arith.subf %98, %103 : vector<16x64xf32>
    %105 = arith.mulf %104, %104 : vector<16x64xf32>
    %cst_37 = arith.constant dense<0.000000e+00> : vector<64xf32>
    %106 = vector.multi_reduction <add>, %105, %cst_37 [0] : vector<16x64xf32> to vector<64xf32>
    %107 = vector.shape_cast %106 : vector<64xf32> to vector<1x64xf32>
    %cst_38 = arith.constant 1.600000e+01 : f32
    %108 = vector.broadcast %cst_38 : f32 to vector<1x64xf32>
    %109 = arith.divf %107, %108 : vector<1x64xf32>
    %110 = vector.broadcast %102 : vector<1x64xf32> to vector<16x64xf32>
    %111 = arith.subf %98, %110 : vector<16x64xf32>
    %cst_39 = arith.constant 9.99999974E-6 : f32
    %112 = vector.broadcast %cst_39 : f32 to vector<1x64xf32>
    %113 = arith.addf %109, %112 : vector<1x64xf32>
    %114 = math.rsqrt %113 : vector<1x64xf32>
    %115 = vector.broadcast %114 : vector<1x64xf32> to vector<16x64xf32>
    %116 = arith.mulf %111, %115 : vector<16x64xf32>
    %117 = vector.extract_strided_slice %8 {offsets = [2, 0], sizes = [1, 64], strides = [1, 1]} : vector<16x128xf32> to vector<1x64xf32>
    %118 = vector.broadcast %117 : vector<1x64xf32> to vector<16x64xf32>
    %119 = arith.mulf %116, %118 : vector<16x64xf32>
    %120 = vector.extract_strided_slice %8 {offsets = [3, 0], sizes = [1, 64], strides = [1, 1]} : vector<16x128xf32> to vector<1x64xf32>
    %121 = vector.broadcast %120 : vector<1x64xf32> to vector<16x64xf32>
    %122 = arith.addf %119, %121 : vector<16x64xf32>
    %cst_40 = arith.constant dense<0.000000e+00> : vector<64xf32>
    %123 = vector.multi_reduction <add>, %122, %cst_40 [0] : vector<16x64xf32> to vector<64xf32>
    %124 = vector.shape_cast %123 : vector<64xf32> to vector<1x64xf32>
    %cst_41 = arith.constant 1.600000e+01 : f32
    %125 = vector.broadcast %cst_41 : f32 to vector<1x64xf32>
    %126 = arith.divf %124, %125 : vector<1x64xf32>
    %c352 = arith.constant 352 : index
    %c0_42 = arith.constant 0 : index
    %127 = vector.load %arg4[%c352, %c0_42] : memref<832x128xf32, #tpu.memory_space<vmem>>, vector<64x128xf32>
    %cst_43 = arith.constant dense<0.000000e+00> : vector<1x128xf32>
    %128 = tpu.matmul %126, %127, %cst_43 {dimension_numbers = #tpu.dot_dimension_numbers<[1], [0], [0], [1], [0, 0, 1, 1], [], []>} : vector<1x64xf32>, vector<64x128xf32>, vector<1x128xf32> -> vector<1x128xf32>
    %129 = vector.extract_strided_slice %8 {offsets = [4, 0], sizes = [1, 128], strides = [1, 1]} : vector<16x128xf32> to vector<1x128xf32>
    %130 = arith.addf %128, %129 : vector<1x128xf32>
    %131 = vector.extract_strided_slice %130 {offsets = [0, 0], sizes = [1, 64], strides = [1, 1]} : vector<1x128xf32> to vector<1x64xf32>
    %132 = vector.extract_strided_slice %130 {offsets = [0, 64], sizes = [1, 1], strides = [1, 1]} : vector<1x128xf32> to vector<1x1xf32>
    %133 = vector.broadcast %131 : vector<1x64xf32> to vector<16x64xf32>
    %134 = arith.mulf %95, %133 : vector<16x64xf32>
    %135 = arith.mulf %134, %134 : vector<16x64xf32>
    %cst_44 = arith.constant dense<0.000000e+00> : vector<16xf32>
    %136 = vector.multi_reduction <add>, %135, %cst_44 [1] : vector<16x64xf32> to vector<16xf32>
    %137 = vector.shape_cast %136 : vector<16xf32> to vector<16x1xf32>
    %cst_45 = arith.constant 1.000000e-24 : f32
    %138 = vector.broadcast %cst_45 : f32 to vector<16x1xf32>
    %139 = arith.maximumf %137, %138 : vector<16x1xf32>
    %140 = math.rsqrt %139 : vector<16x1xf32>
    %cst_46 = arith.constant 0.000000e+00 : f32
    %141 = vector.broadcast %cst_46 : f32 to vector<16x64xf32>
    %142 = arith.maximumf %95, %141 : vector<16x64xf32>
    %143 = vector.broadcast %140 : vector<16x1xf32> to vector<16x64xf32>
    %144 = arith.mulf %134, %143 : vector<16x64xf32>
    %145 = tpu.concatenate %142, %144 in 1 : vector<16x64xf32>, vector<16x64xf32> -> vector<16x128xf32>
    %146 = vector.extract_strided_slice %2 {offsets = [16, 0], sizes = [8, 32], strides = [1, 1]} : vector<24x32xf32> to vector<8x32xf32>
    %c416 = arith.constant 416 : index
    %c0_47 = arith.constant 0 : index
    %147 = vector.load %arg4[%c416, %c0_47] : memref<832x128xf32, #tpu.memory_space<vmem>>, vector<32x128xf32>
    %cst_48 = arith.constant dense<0.000000e+00> : vector<8x128xf32>
    %148 = tpu.matmul %146, %147, %cst_48 {dimension_numbers = #tpu.dot_dimension_numbers<[1], [0], [0], [1], [0, 0, 1, 1], [], []>} : vector<8x32xf32>, vector<32x128xf32>, vector<8x128xf32> -> vector<8x128xf32>
    %149 = vector.extract_strided_slice %8 {offsets = [5, 0], sizes = [1, 128], strides = [1, 1]} : vector<16x128xf32> to vector<1x128xf32>
    %150 = vector.broadcast %149 : vector<1x128xf32> to vector<8x128xf32>
    %151 = arith.addf %148, %150 : vector<8x128xf32>
    %152 = vector.extract_strided_slice %151 {offsets = [0, 0], sizes = [8, 64], strides = [1, 1]} : vector<8x128xf32> to vector<8x64xf32>
    %153 = vector.extract_strided_slice %5 {offsets = [0, 2], sizes = [8, 1], strides = [1, 1]} : vector<80x4xi32> to vector<8x1xi32>
    %154 = vector.extract_strided_slice %5 {offsets = [0, 3], sizes = [8, 1], strides = [1, 1]} : vector<80x4xi32> to vector<8x1xi32>
    %155 = tpu.iota {dimensions = array<i32: 1>} : vector<8x16xi32>
    %156 = vector.broadcast %153 : vector<8x1xi32> to vector<8x16xi32>
    %157 = arith.cmpi eq, %155, %156 : vector<8x16xi32>
    %158 = arith.extui %157 : vector<8x16xi1> to vector<8x16xi32>
    %159 = arith.sitofp %158 : vector<8x16xi32> to vector<8x16xf32>
    %160 = tpu.iota {dimensions = array<i32: 1>} : vector<8x8xi32>
    %161 = vector.broadcast %154 : vector<8x1xi32> to vector<8x8xi32>
    %162 = arith.cmpi eq, %160, %161 : vector<8x8xi32>
    %163 = arith.extui %162 : vector<8x8xi1> to vector<8x8xi32>
    %164 = arith.sitofp %163 : vector<8x8xi32> to vector<8x8xf32>
    %cst_49 = arith.constant dense<0.000000e+00> : vector<8x64xf32>
    %165 = tpu.matmul %164, %152, %cst_49 {dimension_numbers = #tpu.dot_dimension_numbers<[1], [0], [0], [1], [0, 0, 1, 1], [], []>} : vector<8x8xf32>, vector<8x64xf32>, vector<8x64xf32> -> vector<8x64xf32>
    %166 = tpu.concatenate %52, %145 in 1 : vector<16x64xf32>, vector<16x128xf32> -> vector<16x192xf32>
    %cst_50 = arith.constant dense<0.000000e+00> : vector<8x192xf32>
    %167 = tpu.matmul %159, %166, %cst_50 {dimension_numbers = #tpu.dot_dimension_numbers<[1], [0], [0], [1], [0, 0, 1, 1], [], []>} : vector<8x16xf32>, vector<16x192xf32>, vector<8x192xf32> -> vector<8x192xf32>
    %168 = vector.extract_strided_slice %167 {offsets = [0, 0], sizes = [8, 64], strides = [1, 1]} : vector<8x192xf32> to vector<8x64xf32>
    %169 = vector.extract_strided_slice %167 {offsets = [0, 64], sizes = [8, 128], strides = [1, 1]} : vector<8x192xf32> to vector<8x128xf32>
    %170 = arith.mulf %165, %168 : vector<8x64xf32>
    %171 = arith.mulf %170, %170 : vector<8x64xf32>
    %cst_51 = arith.constant dense<0.000000e+00> : vector<8xf32>
    %172 = vector.multi_reduction <add>, %171, %cst_51 [1] : vector<8x64xf32> to vector<8xf32>
    %173 = vector.shape_cast %172 : vector<8xf32> to vector<8x1xf32>
    %cst_52 = arith.constant 1.000000e-24 : f32
    %174 = vector.broadcast %cst_52 : f32 to vector<8x1xf32>
    %175 = arith.maximumf %173, %174 : vector<8x1xf32>
    %176 = math.rsqrt %175 : vector<8x1xf32>
    %cst_53 = arith.constant 0.000000e+00 : f32
    %177 = vector.broadcast %cst_53 : f32 to vector<8x64xf32>
    %178 = arith.maximumf %165, %177 : vector<8x64xf32>
    %179 = vector.broadcast %176 : vector<8x1xf32> to vector<8x64xf32>
    %180 = arith.mulf %170, %179 : vector<8x64xf32>
    %181 = tpu.concatenate %178, %180, %169 in 1 : vector<8x64xf32>, vector<8x64xf32>, vector<8x128xf32> -> vector<8x256xf32>
    %c448 = arith.constant 448 : index
    %c0_54 = arith.constant 0 : index
    %182 = vector.load %arg4[%c448, %c0_54] : memref<832x128xf32, #tpu.memory_space<vmem>>, vector<256x128xf32>
    %cst_55 = arith.constant dense<0.000000e+00> : vector<8x128xf32>
    %183 = tpu.matmul %181, %182, %cst_55 {dimension_numbers = #tpu.dot_dimension_numbers<[1], [0], [0], [1], [0, 0, 1, 1], [], []>} : vector<8x256xf32>, vector<256x128xf32>, vector<8x128xf32> -> vector<8x128xf32>
    %184 = vector.extract_strided_slice %183 {offsets = [0, 0], sizes = [8, 64], strides = [1, 1]} : vector<8x128xf32> to vector<8x64xf32>
    %185 = vector.extract_strided_slice %8 {offsets = [6, 0], sizes = [1, 64], strides = [1, 1]} : vector<16x128xf32> to vector<1x64xf32>
    %186 = vector.broadcast %185 : vector<1x64xf32> to vector<8x64xf32>
    %187 = arith.addf %184, %186 : vector<8x64xf32>
    %cst_56 = arith.constant 0.000000e+00 : f32
    %188 = vector.broadcast %cst_56 : f32 to vector<8x64xf32>
    %189 = arith.maximumf %187, %188 : vector<8x64xf32>
    %190 = vector.extract_strided_slice %183 {offsets = [0, 64], sizes = [8, 1], strides = [1, 1]} : vector<8x128xf32> to vector<8x1xf32>
    %cst_57 = arith.constant dense<0.000000e+00> : vector<1xf32>
    %191 = vector.multi_reduction <add>, %190, %cst_57 [0] : vector<8x1xf32> to vector<1xf32>
    %192 = vector.shape_cast %191 : vector<1xf32> to vector<1x1xf32>
    %cst_58 = arith.constant 8.000000e+00 : f32
    %193 = vector.broadcast %cst_58 : f32 to vector<1x1xf32>
    %194 = arith.divf %192, %193 : vector<1x1xf32>
    %195 = vector.extract_strided_slice %8 {offsets = [6, 64], sizes = [1, 1], strides = [1, 1]} : vector<16x128xf32> to vector<1x1xf32>
    %196 = arith.addf %194, %195 : vector<1x1xf32>
    %c704 = arith.constant 704 : index
    %c0_59 = arith.constant 0 : index
    %197 = vector.load %arg4[%c704, %c0_59] : memref<832x128xf32, #tpu.memory_space<vmem>>, vector<64x128xf32>
    %cst_60 = arith.constant dense<0.000000e+00> : vector<8x128xf32>
    %198 = tpu.matmul %189, %197, %cst_60 {dimension_numbers = #tpu.dot_dimension_numbers<[1], [0], [0], [1], [0, 0, 1, 1], [], []>} : vector<8x64xf32>, vector<64x128xf32>, vector<8x128xf32> -> vector<8x128xf32>
    %199 = vector.extract_strided_slice %198 {offsets = [0, 0], sizes = [8, 64], strides = [1, 1]} : vector<8x128xf32> to vector<8x64xf32>
    %200 = vector.extract_strided_slice %8 {offsets = [7, 0], sizes = [1, 64], strides = [1, 1]} : vector<16x128xf32> to vector<1x64xf32>
    %201 = vector.broadcast %200 : vector<1x64xf32> to vector<8x64xf32>
    %202 = arith.addf %199, %201 : vector<8x64xf32>
    %cst_61 = arith.constant 0.000000e+00 : f32
    %203 = vector.broadcast %cst_61 : f32 to vector<8x64xf32>
    %204 = arith.maximumf %202, %203 : vector<8x64xf32>
    %c768 = arith.constant 768 : index
    %c0_62 = arith.constant 0 : index
    %205 = vector.load %arg4[%c768, %c0_62] : memref<832x128xf32, #tpu.memory_space<vmem>>, vector<64x128xf32>
    %cst_63 = arith.constant dense<0.000000e+00> : vector<8x128xf32>
    %206 = tpu.matmul %204, %205, %cst_63 {dimension_numbers = #tpu.dot_dimension_numbers<[1], [0], [0], [1], [0, 0, 1, 1], [], []>} : vector<8x64xf32>, vector<64x128xf32>, vector<8x128xf32> -> vector<8x128xf32>
    %207 = vector.extract_strided_slice %206 {offsets = [0, 0], sizes = [8, 1], strides = [1, 1]} : vector<8x128xf32> to vector<8x1xf32>
    %208 = vector.extract_strided_slice %8 {offsets = [8, 0], sizes = [1, 1], strides = [1, 1]} : vector<16x128xf32> to vector<1x1xf32>
    %209 = vector.broadcast %208 : vector<1x1xf32> to vector<8x1xf32>
    %210 = arith.addf %207, %209 : vector<8x1xf32>
    %211 = tpu.iota {dimensions = array<i32: 1>} : vector<8x128xi32>
    %212 = tpu.iota {dimensions = array<i32: 0>} : vector<8x128xi32>
    %c2_i32 = arith.constant 2 : i32
    %213 = vector.broadcast %c2_i32 : i32 to vector<8x128xi32>
    %214 = arith.addi %212, %213 : vector<8x128xi32>
    %215 = arith.cmpi eq, %211, %214 : vector<8x128xi32>
    %216 = arith.extui %215 : vector<8x128xi1> to vector<8x128xi32>
    %217 = arith.sitofp %216 : vector<8x128xi32> to vector<8x128xf32>
    %218 = vector.broadcast %210 : vector<8x1xf32> to vector<8x128xf32>
    %219 = arith.mulf %218, %217 : vector<8x128xf32>
    %cst_64 = arith.constant dense<0.000000e+00> : vector<128xf32>
    %220 = vector.multi_reduction <add>, %219, %cst_64 [0] : vector<8x128xf32> to vector<128xf32>
    %221 = vector.shape_cast %220 : vector<128xf32> to vector<1x128xf32>
    %222 = tpu.iota {dimensions = array<i32: 1>} : vector<1x128xi32>
    %c0_i32 = arith.constant 0 : i32
    %223 = vector.broadcast %c0_i32 : i32 to vector<1x128xi32>
    %224 = arith.cmpi eq, %222, %223 : vector<1x128xi32>
    %225 = arith.extui %224 : vector<1x128xi1> to vector<1x128xi32>
    %226 = arith.sitofp %225 : vector<1x128xi32> to vector<1x128xf32>
    %227 = vector.broadcast %196 : vector<1x1xf32> to vector<1x128xf32>
    %228 = arith.mulf %227, %226 : vector<1x128xf32>
    %229 = arith.addf %221, %228 : vector<1x128xf32>
    %c1_i32 = arith.constant 1 : i32
    %230 = vector.broadcast %c1_i32 : i32 to vector<1x128xi32>
    %231 = arith.cmpi eq, %222, %230 : vector<1x128xi32>
    %232 = arith.extui %231 : vector<1x128xi1> to vector<1x128xi32>
    %233 = arith.sitofp %232 : vector<1x128xi32> to vector<1x128xf32>
    %234 = vector.broadcast %132 : vector<1x1xf32> to vector<1x128xf32>
    %235 = arith.mulf %234, %233 : vector<1x128xf32>
    %236 = arith.addf %229, %235 : vector<1x128xf32>
    %237 = vector.shape_cast %236 : vector<1x128xf32> to vector<1x128xf32>
    %238 = vector.broadcast %237 : vector<1x128xf32> to vector<8x128xf32>
    %c0_65 = arith.constant 0 : index
    %c0_66 = arith.constant 0 : index
    %c0_67 = arith.constant 0 : index
    %239 = vector.load %arg6[%c0_65, %c0_66, %c0_67] : memref<1x8x128xf32, #tpu.memory_space<vmem>>, vector<1x8x128xf32>
    %240 = vector.shape_cast %239 : vector<1x8x128xf32> to vector<8x128xf32>
    %241 = vector.shape_cast %238 : vector<8x128xf32> to vector<1x8x128xf32>
    tpu.vector_store %arg6[%c0_65, %c0_66, %c0_67], %241 {strides = array<i32>} : memref<1x8x128xf32, #tpu.memory_space<vmem>>, vector<1x8x128xf32>,
    return
  }
  func.func @transform_0(%arg0: i32) -> (i32, i32, i32) {
    %c0_i32 = arith.constant 0 : i32
    %c0_i32_0 = arith.constant 0 : i32
    %c0_i32_1 = arith.constant 0 : i32
    return %arg0, %c0_i32, %c0_i32_0 : i32, i32, i32
  }
  func.func @transform_1(%arg0: i32) -> (i32, i32, i32) {
    %c0_i32 = arith.constant 0 : i32
    %c0_i32_0 = arith.constant 0 : i32
    %c0_i32_1 = arith.constant 0 : i32
    return %arg0, %c0_i32, %c0_i32_0 : i32, i32, i32
  }
  func.func @transform_2(%arg0: i32) -> (i32, i32, i32) {
    %c0_i32 = arith.constant 0 : i32
    %c0_i32_0 = arith.constant 0 : i32
    %c0_i32_1 = arith.constant 0 : i32
    return %arg0, %c0_i32, %c0_i32_0 : i32, i32, i32
  }
  func.func @transform_3(%arg0: i32) -> (i32, i32) {
    %c0_i32 = arith.constant 0 : i32
    %c0_i32_0 = arith.constant 0 : i32
    %c0_i32_1 = arith.constant 0 : i32
    return %c0_i32, %c0_i32_0 : i32, i32
  }
  func.func @transform_4(%arg0: i32) -> (i32, i32) {
    %c0_i32 = arith.constant 0 : i32
    %c0_i32_0 = arith.constant 0 : i32
    %c0_i32_1 = arith.constant 0 : i32
    return %c0_i32, %c0_i32_0 : i32, i32
  }
  func.func @transform_5(%arg0: i32) -> (i32, i32, i32) {
    %c0_i32 = arith.constant 0 : i32
    %c0_i32_0 = arith.constant 0 : i32
    %c0_i32_1 = arith.constant 0 : i32
    return %arg0, %c0_i32, %c0_i32_0 : i32, i32, i32
  }
}

</mosaic_0001>

<llo_original>
// kernel: gfn_forward.1
$region0: #{gfn_forward.1}
  #allocation0 [shape = 'u32[]', space=smem, size = 0x4, offset = 0x4, fixed_abs, tag = 'smem constant byte address 0x4 - core index']
  #allocation1 [shape = 'u32[144,128]{1,0:T(1,128)}', space=vmem, size = 0x12000, scoped, tag = 'internal scratch']
  %s0 = inlined_call_operand.vmem [shape: f32[2,40,32], index: 0, kind: input, shape index: {}]
  %s1 = inlined_call_operand.vmem [shape: s32[2,80,4], index: 1, kind: input, shape index: {}]
  %s2 = inlined_call_operand.vmem [shape: s32[2,8,80], index: 2, kind: input, shape index: {}]
  %s3 = inlined_call_operand.vmem [shape: f32[832,128], index: 3, kind: input, shape index: {}]
  %s4 = inlined_call_operand.vmem [shape: f32[16,128], index: 4, kind: input, shape index: {}]
  %s5 = inlined_call_operand.vmem [shape: f32[2,8,128], index: 5, kind: output, shape index: {}]
  %s6 = sld [smem:[#allocation0]]
  $region53: #{gfn_forward.1} parent=0
    _
  %s8 = ssub.s32 1, %s6
  %s9 = scalar_select 0, %s8, %s6
  loop: start=0, step=1, limit=4
  $region2: #{gfn_forward.1} parent=0 // loop_pre_header
    _
  $region3: #{gfn_forward.1} parent=0 // loop_header
    %s11 = sphi 0, %s15
    %p12 = scmp.ge.s32.totalorder %s11, 4
    %s21 = sphi 0, %s23
    %s24 = sphi 0, %s21
    %s25 = sphi 0, %s24
    %s41 = sphi 0, %s25
    %s47 = sphi 0, %s49
    %s50 = sphi 0, %s47
    %s51 = sphi 0, %s50
    %s67 = sphi 0, %s51
    %s73 = sphi 0, %s75
    %s76 = sphi 0, %s73
    %s77 = sphi 0, %s76
    %s93 = sphi 0, %s77
    %s97 = sphi 0, %s97
    %s99 = sphi 0, %s97
    %s100 = sphi 0, %s99
    %s114 = sphi 0, %s100
    %s118 = sphi 0, %s118
    %s120 = sphi 0, %s118
    %s121 = sphi 0, %s120
    %s135 = sphi 0, %s121
    %s141 = sphi 0, %s143
    %s144 = sphi 0, %s141
    %s145 = sphi 0, %s144
    %s161 = sphi 0, %s145
  $region4: #{gfn_forward.1} parent=0 // loop_header_branch
    %14 = sbr.rel (%p12) target = $region8
  $region5: #{gfn_forward.1} parent=0 // loop_body
    %s16 = ssub.s32 %s11, 1
    %s17 = ssub.s32 %s11, 2
    %s18 = sadd.s32 %s11, 1
    %s19 = ssub.s32 %s11, %s18
    %p20 = scmp.eq.s32.totalorder %s19, 0
    %s22 = sadd.s32 %s21, 1
    %s23 = scalar_select %p20, %s21, %s22
    %p26 = pneg %p20
    %p27 = scmp.eq.s32.totalorder %s11, 1
    %p28 = por %p26, %p27
    %p29 = scmp.ne.s32.totalorder %s21, %s24
    %p30 = scmp.eq.s32.totalorder %s11, 0
    %p31 = por %p29, %p30
    %p32 = scmp.ne.s32.totalorder %s21, %s24
    %p33 = scmp.eq.s32.totalorder %s16, 1
    %p34 = por %p32, %p33
    %p35 = scmp.ne.s32.totalorder %s24, %s25
    %p36 = scmp.eq.s32.totalorder %s16, 0
    %p37 = por %p35, %p36
    %p38 = scmp.ne.s32.totalorder %s24, %s25
    %p39 = scmp.eq.s32.totalorder %s17, 1
    %p40 = por %p38, %p39
    %p42 = scmp.ne.s32.totalorder %s25, %s41
    %p43 = scmp.eq.s32.totalorder %s17, 0
    %p44 = por %p42, %p43
    %s45 = ssub.s32 %s11, %s18
    %p46 = scmp.eq.s32.totalorder %s45, 0
    %s48 = sadd.s32 %s47, 1
    %s49 = scalar_select %p46, %s47, %s48
    %p52 = pneg %p46
    %p53 = scmp.eq.s32.totalorder %s11, 1
    %p54 = por %p52, %p53
    %p55 = scmp.ne.s32.totalorder %s47, %s50
    %p56 = scmp.eq.s32.totalorder %s11, 0
    %p57 = por %p55, %p56
    %p58 = scmp.ne.s32.totalorder %s47, %s50
    %p59 = scmp.eq.s32.totalorder %s16, 1
    %p60 = por %p58, %p59
    %p61 = scmp.ne.s32.totalorder %s50, %s51
    %p62 = scmp.eq.s32.totalorder %s16, 0
    %p63 = por %p61, %p62
    %p64 = scmp.ne.s32.totalorder %s50, %s51
    %p65 = scmp.eq.s32.totalorder %s17, 1
    %p66 = por %p64, %p65
    %p68 = scmp.ne.s32.totalorder %s51, %s67
    %p69 = scmp.eq.s32.totalorder %s17, 0
    %p70 = por %p68, %p69
    %s71 = ssub.s32 %s11, %s18
    %p72 = scmp.eq.s32.totalorder %s71, 0
    %s74 = sadd.s32 %s73, 1
    %s75 = scalar_select %p72, %s73, %s74
    %p78 = pneg %p72
    %p79 = scmp.eq.s32.totalorder %s11, 1
    %p80 = por %p78, %p79
    %p81 = scmp.ne.s32.totalorder %s73, %s76
    %p82 = scmp.eq.s32.totalorder %s11, 0
    %p83 = por %p81, %p82
    %p84 = scmp.ne.s32.totalorder %s73, %s76
    %p85 = scmp.eq.s32.totalorder %s16, 1
    %p86 = por %p84, %p85
    %p87 = scmp.ne.s32.totalorder %s76, %s77
    %p88 = scmp.eq.s32.totalorder %s16, 0
    %p89 = por %p87, %p88
    %p90 = scmp.ne.s32.totalorder %s76, %s77
    %p91 = scmp.eq.s32.totalorder %s17, 1
    %p92 = por %p90, %p91
    %p94 = scmp.ne.s32.totalorder %s77, %s93
    %p95 = scmp.eq.s32.totalorder %s17, 0
    %p96 = por %p94, %p95
    %s98 = sadd.s32 %s97, 1
    %p101 = scmp.eq.s32.totalorder %s11, 1
    %p102 = scmp.ne.s32.totalorder %s97, %s99
    %p103 = scmp.eq.s32.totalorder %s11, 0
    %p104 = por %p102, %p103
    %p105 = scmp.ne.s32.totalorder %s97, %s99
    %p106 = scmp.eq.s32.totalorder %s16, 1
    %p107 = por %p105, %p106
    %p108 = scmp.ne.s32.totalorder %s99, %s100
    %p109 = scmp.eq.s32.totalorder %s16, 0
    %p110 = por %p108, %p109
    %p111 = scmp.ne.s32.totalorder %s99, %s100
    %p112 = scmp.eq.s32.totalorder %s17, 1
    %p113 = por %p111, %p112
    %p115 = scmp.ne.s32.totalorder %s100, %s114
    %p116 = scmp.eq.s32.totalorder %s17, 0
    %p117 = por %p115, %p116
    %s119 = sadd.s32 %s118, 1
    %p122 = scmp.eq.s32.totalorder %s11, 1
    %p123 = scmp.ne.s32.totalorder %s118, %s120
    %p124 = scmp.eq.s32.totalorder %s11, 0
    %p125 = por %p123, %p124
    %p126 = scmp.ne.s32.totalorder %s118, %s120
    %p127 = scmp.eq.s32.totalorder %s16, 1
    %p128 = por %p126, %p127
    %p129 = scmp.ne.s32.totalorder %s120, %s121
    %p130 = scmp.eq.s32.totalorder %s16, 0
    %p131 = por %p129, %p130
    %p132 = scmp.ne.s32.totalorder %s120, %s121
    %p133 = scmp.eq.s32.totalorder %s17, 1
    %p134 = por %p132, %p133
    %p136 = scmp.ne.s32.totalorder %s121, %s135
    %p137 = scmp.eq.s32.totalorder %s17, 0
    %p138 = por %p136, %p137
    %s139 = ssub.s32 %s11, %s18
    %p140 = scmp.eq.s32.totalorder %s139, 0
    %s142 = sadd.s32 %s141, 1
    %s143 = scalar_select %p140, %s141, %s142
    %p146 = pneg %p140
    %p147 = scmp.eq.s32.totalorder %s11, 1
    %p148 = por %p146, %p147
    %p149 = scmp.ne.s32.totalorder %s141, %s144
    %p150 = scmp.eq.s32.totalorder %s11, 0
    %p151 = por %p149, %p150
    %p152 = scmp.ne.s32.totalorder %s141, %s144
    %p153 = scmp.eq.s32.totalorder %s16, 1
    %p154 = por %p152, %p153
    %p155 = scmp.ne.s32.totalorder %s144, %s145
    %p156 = scmp.eq.s32.totalorder %s16, 0
    %p157 = por %p155, %p156
    %p158 = scmp.ne.s32.totalorder %s144, %s145
    %p159 = scmp.eq.s32.totalorder %s17, 1
    %p160 = por %p158, %p159
    %p162 = scmp.ne.s32.totalorder %s145, %s161
    %p163 = scmp.eq.s32.totalorder %s17, 0
    %p164 = por %p162, %p163
    %p165 = scmp.le.s32.totalorder 1, %s11
    %p166 = scmp.lt.s32.totalorder %s11, 3
    %p167 = pnand %p165, %p166
    %p168 = pneg %p167
    // Predicated region
    $region9: #{gfn_forward.1} parent=5 // pred_check
      _
    $region10: #{gfn_forward.1} parent=5 // pred_check_branch
      %170 = sbr.rel (%p167) target = $region12
    $region11: #{gfn_forward.1} parent=5 // pred_region
      %s171 = ssub.s32 %s11, 1
      // Predicated region
      $region13: #{gfn_forward.1} parent=11 // pred_check
        %p172 = pneg %p110
      $region14: #{gfn_forward.1} parent=11 // pred_check_branch
        %174 = sbr.rel (%p172) target = $region16
      $region15: #{gfn_forward.1} parent=11 // pred_region
        _
      $region16: #{gfn_forward.1} parent=11 // pred_fallthru
        _
      // Predicated region
      $region17: #{gfn_forward.1} parent=11 // pred_check
        %p175 = pneg %p131
      $region18: #{gfn_forward.1} parent=11 // pred_check_branch
        %177 = sbr.rel (%p175) target = $region20
      $region19: #{gfn_forward.1} parent=11 // pred_region
        _
      $region20: #{gfn_forward.1} parent=11 // pred_fallthru
        _
    $region12: #{gfn_forward.1} parent=5 // pred_fallthru
      _
    %p178 = scmp.lt.s32.totalorder %s11, 2
    // Predicated region
    $region21: #{gfn_forward.1} parent=5 // pred_check
      %p179 = pneg %p178
    $region22: #{gfn_forward.1} parent=5 // pred_check_branch
      %181 = sbr.rel (%p179) target = $region24
    $region23: #{gfn_forward.1} parent=5 // pred_region
      // Predicated region
      $region25: #{gfn_forward.1} parent=23 // pred_check
        %p182 = pneg %p31
      $region26: #{gfn_forward.1} parent=23 // pred_check_branch
        %184 = sbr.rel (%p182) target = $region28
      $region27: #{gfn_forward.1} parent=23 // pred_region
        %p185 = scmp.lt.s32.totalorder %s11, 1
        %s186 = scalar_select %p185, %s11, 1
        %s187 = smul.addr %s186, 5
        %s188 = smul.addr %s187, 8
        %s189 = scalar_lea.vmem %s0, %s188
      $region28: #{gfn_forward.1} parent=23 // pred_fallthru
        _
      // Predicated region
      $region29: #{gfn_forward.1} parent=23 // pred_check
        %p190 = pneg %p57
      $region30: #{gfn_forward.1} parent=23 // pred_check_branch
        %192 = sbr.rel (%p190) target = $region32
      $region31: #{gfn_forward.1} parent=23 // pred_region
        %p193 = scmp.lt.s32.totalorder %s11, 1
        %s194 = scalar_select %p193, %s11, 1
        %s195 = smul.addr %s194, 10
        %s196 = smul.addr %s195, 8
        %s197 = scalar_lea.vmem %s1, %s196
      $region32: #{gfn_forward.1} parent=23 // pred_fallthru
        _
      // Predicated region
      $region33: #{gfn_forward.1} parent=23 // pred_check
        %p198 = pneg %p83
      $region34: #{gfn_forward.1} parent=23 // pred_check_branch
        %200 = sbr.rel (%p198) target = $region36
      $region35: #{gfn_forward.1} parent=23 // pred_region
        %p201 = scmp.lt.s32.totalorder %s11, 1
        %s202 = scalar_select %p201, %s11, 1
        %s203 = smul.addr %s202, 8
        %s204 = scalar_lea.vmem %s2, %s203
      $region36: #{gfn_forward.1} parent=23 // pred_fallthru
        _
    $region24: #{gfn_forward.1} parent=5 // pred_fallthru
      _
    %p205 = scmp.le.s32.totalorder 1, %s11
    %p206 = scmp.lt.s32.totalorder %s11, 3
    %p207 = pnand %p205, %p206
    %p208 = pneg %p207
    // Predicated region
    $region37: #{gfn_forward.1} parent=5 // pred_check
      _
    $region38: #{gfn_forward.1} parent=5 // pred_check_branch
      %210 = sbr.rel (%p207) target = $region40
    $region39: #{gfn_forward.1} parent=5 // pred_region
      %s211 = ssub.s32 %s11, 1
      %p212 = scmp.lt.s32.totalorder %s16, 1
      %s213 = scalar_select %p212, %s16, 1
      %s214 = smul.addr %s213, 5
      %s215 = smul.addr %s214, 8
      %s216 = scalar_lea.vmem %s0, %s215
      %p217 = pneg %p37
      %p218 = pneg %p34
      %p219 = scmp.lt.s32.totalorder %s16, 1
      %s220 = scalar_select %p219, %s16, 1
      %s221 = smul.addr %s220, 10
      %s222 = smul.addr %s221, 8
      %s223 = scalar_lea.vmem %s1, %s222
      %p224 = pneg %p63
      %p225 = pneg %p60
      %p226 = scmp.lt.s32.totalorder %s16, 1
      %s227 = scalar_select %p226, %s16, 1
      %s228 = smul.addr %s227, 8
      %s229 = scalar_lea.vmem %s2, %s228
      %p230 = pneg %p89
      %p231 = pneg %p86
      %p232 = pneg %p110
      %p233 = pneg %p107
      %p234 = pneg %p131
      %p235 = pneg %p128
      %p236 = pneg %p157
      %p237 = pneg %p154
      %p238 = scmp.lt.s32.totalorder %s16, 1
      %s239 = scalar_select %p238, %s16, 1
      %s240 = smul.addr %s239, 8
      %s241 = scalar_lea.vmem %s5, %s240
      %p242 = scmp.lt.s32.totalorder %s16, 1
      %s243 = scalar_select %p242, %s16, 1
      %s244 = smul.addr %s243, 5
      %s245 = smul.addr %s244, 8
      %s246 = scalar_lea.vmem %s0, %s245
      %p247 = scmp.lt.s32.totalorder %s16, 1
      %s248 = scalar_select %p247, %s16, 1
      %s249 = smul.addr %s248, 10
      %s250 = smul.addr %s249, 8
      %s251 = scalar_lea.vmem %s1, %s250
      %p252 = scmp.lt.s32.totalorder %s16, 1
      %s253 = scalar_select %p252, %s16, 1
      %s254 = smul.addr %s253, 8
      %s255 = scalar_lea.vmem %s2, %s254
      %p256 = scmp.lt.s32.totalorder %s16, 1
      %s257 = scalar_select %p256, %s16, 1
      %s258 = smul.addr %s257, 8
      %s259 = scalar_lea.vmem %s5, %s258
      %v260 = vld [vmem:[%s246] sm:$0xff]
      %v261 = vld [vmem:[%s246 + $0x8] sm:$0xff]
      %v262 = vld [vmem:[%s246 + $0x10] sm:$0xff]
      %v263 = vld [vmem:[%s246 + $0x18] sm:$0xff]
      %v264 = vld [vmem:[%s246 + $0x20] sm:$0xff]
      %v265 = vld [vmem:[%s251] sm:$0xff]
      %v266 = vld [vmem:[%s251 + $0x8] sm:$0xff]
      %v267 = vld [vmem:[%s251 + $0x10] sm:$0xff]
      %v268 = vld [vmem:[%s251 + $0x18] sm:$0xff]
      %v269 = vld [vmem:[%s251 + $0x20] sm:$0xff]
      %v270 = vld [vmem:[%s251 + $0x28] sm:$0xff]
      %v271 = vld [vmem:[%s251 + $0x30] sm:$0xff]
      %v272 = vld [vmem:[%s251 + $0x38] sm:$0xff]
      %v273 = vld [vmem:[%s251 + $0x40] sm:$0xff]
      %v274 = vld [vmem:[%s251 + $0x48] sm:$0xff]
      %v275 = vld [vmem:[%s255] sm:$0xff]
      %v276 = vld [vmem:[%s4] sm:$0xff]
      %v277 = vld [vmem:[%s4 + $0x8] sm:$0xff]
      %v278 = vlaneseq
      %v279 = vand.u32 %v278, 127
      %280 = vset.pattern.permute.xlu0 0
      %281 = vperm.xlu0 %280, %v265
      %v282 = vpop.permute.xlu0 %281
      %283 = vset.pattern.permute.xlu0 0
      %284 = vperm.xlu0 %283, %v266
      %v285 = vpop.permute.xlu0 %284
      %286 = vset.pattern.permute.xlu0 0
      %287 = vperm.xlu0 %286, %v267
      %v288 = vpop.permute.xlu0 %287
      %289 = vset.pattern.permute.xlu0 0
      %290 = vperm.xlu0 %289, %v268
      %v291 = vpop.permute.xlu0 %290
      %292 = vset.pattern.permute.xlu0 0
      %293 = vperm.xlu0 %292, %v269
      %v294 = vpop.permute.xlu0 %293
      %295 = vset.pattern.permute.xlu0 0
      %296 = vperm.xlu0 %295, %v270
      %v297 = vpop.permute.xlu0 %296
      %298 = vset.pattern.permute.xlu0 0
      %299 = vperm.xlu0 %298, %v271
      %v300 = vpop.permute.xlu0 %299
      %301 = vset.pattern.permute.xlu0 0
      %302 = vperm.xlu0 %301, %v272
      %v303 = vpop.permute.xlu0 %302
      %304 = vset.pattern.permute.xlu0 0
      %305 = vperm.xlu0 %304, %v273
      %v306 = vpop.permute.xlu0 %305
      %307 = vset.pattern.permute.xlu0 0
      %308 = vperm.xlu0 %307, %v274
      %v309 = vpop.permute.xlu0 %308
      %vm310 = vcmp.eq.s32.totalorder %v279, %v282
      %vm311 = vcmp.eq.s32.totalorder %v279, %v285
      %vm312 = vcmp.eq.s32.totalorder %v279, %v288
      %vm313 = vcmp.eq.s32.totalorder %v279, %v291
      %vm314 = vcmp.eq.s32.totalorder %v279, %v294
      %vm315 = vcmp.eq.s32.totalorder %v279, %v297
      %vm316 = vcmp.eq.s32.totalorder %v279, %v300
      %vm317 = vcmp.eq.s32.totalorder %v279, %v303
      %vm318 = vcmp.eq.s32.totalorder %v279, %v306
      %vm319 = vcmp.eq.s32.totalorder %v279, %v309
      %v320 = vsel %vm310, 1, 0
      %v321 = vsel %vm311, 1, 0
      %v322 = vsel %vm312, 1, 0
      %v323 = vsel %vm313, 1, 0
      %v324 = vsel %vm314, 1, 0
      %v325 = vsel %vm315, 1, 0
      %v326 = vsel %vm316, 1, 0
      %v327 = vsel %vm317, 1, 0
      %v328 = vsel %vm318, 1, 0
      %v329 = vsel %vm319, 1, 0
      %v330 = vcvt.s32.f32 %v320
      %v331 = vcvt.s32.f32 %v321
      %v332 = vcvt.s32.f32 %v322
      %v333 = vcvt.s32.f32 %v323
      %v334 = vcvt.s32.f32 %v324
      %v335 = vcvt.s32.f32 %v325
      %v336 = vcvt.s32.f32 %v326
      %v337 = vcvt.s32.f32 %v327
      %v338 = vcvt.s32.f32 %v328
      %v339 = vcvt.s32.f32 %v329
      %vm340 = vcmask 195584
      %v342 = vsel %vm340, %v330, 0
      %v345 = vsel %vm340, %v331, 0
      %v348 = vsel %vm340, %v332, 0
      %v351 = vsel %vm340, %v333, 0
      %v354 = vsel %vm340, %v334, 0
      %v357 = vsel %vm340, %v335, 0
      %v360 = vsel %vm340, %v336, 0
      %v363 = vsel %vm340, %v337, 0
      %v366 = vsel %vm340, %v338, 0
      %v369 = vsel %vm340, %v339, 0
      %371 = vmatprep.subr.mxu0 0.0
      %372 = vmatpush1.msra.mxu0 %v260
      %373 = vmatprep.subr.mxu0 0.0
      %374 = vmatpush1.msra.mxu0 %v261
      %375 = vmatprep.subr.mxu0 0.0
      %376 = vmatpush1.msra.mxu0 %v262
      %377 = vmatprep.subr.mxu0 0.0
      %378 = vmatpush1.msra.mxu0 0.0
      %379 = vmatprep.subr.mxu0 0.0
      %380 = vmatpush1.msra.mxu0 0.0
      %381 = vmatprep.subr.mxu0 0.0
      %382 = vmatpush1.msra.mxu0 0.0
      %383 = vmatprep.subr.mxu0 0.0
      %384 = vmatpush1.msra.mxu0 0.0
      %385 = vmatprep.subr.mxu0 0.0
      %386 = vmatpush1.msra.mxu0 0.0
      %387 = vmatprep.subr.mxu0 0.0
      %388 = vmatpush1.msra.mxu0 0.0
      %389 = vmatprep.subr.mxu0 0.0
      %390 = vmatpush1.msra.mxu0 0.0
      %391 = vmatprep.subr.mxu0 0.0
      %392 = vmatpush1.msra.mxu0 0.0
      %393 = vmatprep.subr.mxu0 0.0
      %394 = vmatpush1.msra.mxu0 0.0
      %395 = vmatprep.subr.mxu0 0.0
      %396 = vmatpush1.msra.mxu0 0.0
      %397 = vmatprep.subr.mxu0 0.0
      %398 = vmatpush1.msra.mxu0 0.0
      %399 = vmatprep.subr.mxu0 0.0
      %400 = vmatpush1.msra.mxu0 0.0
      %401 = vmatprep.subr.mxu0 0.0
      %402 = vmatpush1.msra.mxu0 0.0
      %403 = vmatprep.subr.mxu0 0.0
      %404 = vmatpush1.msra.mxu0 0.0
      %405 = vmatprep.subr.mxu0 0.0
      %406 = vmatpush1.msra.mxu0 0.0
      %407 = vmatprep.subr.mxu0 0.0
      %408 = vmatpush1.msra.mxu0 0.0
      %409 = vmatprep.subr.mxu0 0.0
      %410 = vmatpush1.msra.mxu0 0.0
      %411 = vmatprep.subr.mxu0 0.0
      %412 = vmatpush1.msra.mxu0 0.0
      %413 = vmatprep.subr.mxu0 0.0
      %414 = vmatpush1.msra.mxu0 0.0
      %415 = vmatprep.subr.mxu0 0.0
      %416 = vmatpush1.msra.mxu0 0.0
      %417 = vmatprep.subr.mxu0 0.0
      %418 = vmatpush1.msra.mxu0 0.0
      %419 = vmatprep.subr.mxu0 0.0
      %420 = vmatpush1.msra.mxu0 0.0
      %421 = vmatprep.subr.mxu0 0.0
      %422 = vmatpush1.msra.mxu0 0.0
      %423 = vmatprep.subr.mxu0 0.0
      %424 = vmatpush1.msra.mxu0 0.0
      %425 = vmatprep.subr.mxu0 0.0
      %426 = vmatpush1.msra.mxu0 0.0
      %427 = vmatprep.subr.mxu0 0.0
      %428 = vmatpush1.msra.mxu0 0.0
      %429 = vmatprep.subr.mxu0 0.0
      %430 = vmatpush1.msra.mxu0 0.0
      %431 = vmatprep.subr.mxu0 0.0
      %432 = vmatpush1.msra.mxu0 0.0
      %433 = vmatprep.subr.mxu0 0.0
      %434 = vmatpush1.msra.mxu0 0.0
      %435 = vmatprep.mubr.f32.mxu0 0.0
      %436 = vmatmul.mubr.f32.gmra.mrb[0].mxu0 %v342
      %v437 = vpop.f32.mrb[0].mxu0
      %v438 = vadd.f32 0.0, %v437
      %v439 = vpop.f32.mrb[0].mxu0
      %440 = vmatprep.mubr.f32.mxu0 0.0
      %441 = vmatmul.mubr.f32.gmra.mrb[0].mxu0 %v345
      %v442 = vpop.f32.mrb[0].mxu0
      %v443 = vadd.f32 0.0, %v442
      %v444 = vpop.f32.mrb[0].mxu0
      %445 = vmatprep.mubr.f32.mxu0 0.0
      %446 = vmatmul.mubr.f32.gmra.mrb[0].mxu0 %v348
      %v447 = vpop.f32.mrb[0].mxu0
      %v448 = vadd.f32 0.0, %v447
      %v449 = vpop.f32.mrb[0].mxu0
      %450 = vmatprep.mubr.f32.mxu0 0.0
      %451 = vmatmul.mubr.f32.gmra.mrb[0].mxu0 %v351
      %v452 = vpop.f32.mrb[0].mxu0
      %v453 = vadd.f32 0.0, %v452
      %v454 = vpop.f32.mrb[0].mxu0
      %455 = vmatprep.mubr.f32.mxu0 0.0
      %456 = vmatmul.mubr.f32.gmra.mrb[0].mxu0 %v354
      %v457 = vpop.f32.mrb[0].mxu0
      %v458 = vadd.f32 0.0, %v457
      %v459 = vpop.f32.mrb[0].mxu0
      %460 = vmatprep.mubr.f32.mxu0 0.0
      %461 = vmatmul.mubr.f32.gmra.mrb[0].mxu0 %v357
      %v462 = vpop.f32.mrb[0].mxu0
      %v463 = vadd.f32 0.0, %v462
      %v464 = vpop.f32.mrb[0].mxu0
      %465 = vmatprep.mubr.f32.mxu0 0.0
      %466 = vmatmul.mubr.f32.gmra.mrb[0].mxu0 %v360
      %v467 = vpop.f32.mrb[0].mxu0
      %v468 = vadd.f32 0.0, %v467
      %v469 = vpop.f32.mrb[0].mxu0
      %470 = vmatprep.mubr.f32.mxu0 0.0
      %471 = vmatmul.mubr.f32.gmra.mrb[0].mxu0 %v363
      %v472 = vpop.f32.mrb[0].mxu0
      %v473 = vadd.f32 0.0, %v472
      %v474 = vpop.f32.mrb[0].mxu0
      %475 = vmatprep.mubr.f32.mxu0 0.0
      %476 = vmatmul.mubr.f32.gmra.mrb[0].mxu0 %v366
      %v477 = vpop.f32.mrb[0].mxu0
      %v478 = vadd.f32 0.0, %v477
      %v479 = vpop.f32.mrb[0].mxu0
      %480 = vmatprep.mubr.f32.mxu0 0.0
      %481 = vmatmul.mubr.f32.gmra.mrb[0].mxu0 %v369
      %v482 = vpop.f32.mrb[0].mxu0
      %v483 = vadd.f32 0.0, %v482
      %v484 = vpop.f32.mrb[0].mxu0
      %485 = vdwg.mxu0
      %v486 = vlaneseq
      %v487 = vshrl.u32 %v486, 7
      %v488 = vadd.s32 %v487, 8
      %v489 = vadd.s32 %v487, 16
      %v490 = vlaneseq
      %v491 = vshrl.u32 %v490, 7
      %v492 = vsub.s32 0, %v491
      %v493 = vrot.slane %v275, %v492
      %vm494 = vcmp.eq.s32.totalorder %v487, %v493
      %vm495 = vcmp.eq.s32.totalorder %v488, %v493
      %vm496 = vcmp.eq.s32.totalorder %v489, %v493
      %v497 = vsel %vm494, 1, 0
      %v498 = vsel %vm495, 1, 0
      %v499 = vsel %vm496, 1, 0
      %v500 = vcvt.s32.f32 %v497
      %v501 = vcvt.s32.f32 %v498
      %v502 = vcvt.s32.f32 %v499
      %vm503 = vcmask 654336
      %v504 = vsel %vm503, %v500, 0.0
      %505 = vadd.xlane.f32.xlu0 %v504
      %v506 = vpop.xlane.xlu0 %505
      %v507 = vsel %vm503, %v501, 0.0
      %508 = vadd.xlane.f32.xlu0 %v507
      %v509 = vpop.xlane.xlu0 %508
      %v510 = vsel %vm503, %v502, 0.0
      %511 = vadd.xlane.f32.xlu0 %v510
      %v512 = vpop.xlane.xlu0 %511
      %v513 = vmax.f32 %v506, 1.0
      %v514 = vmax.f32 %v509, 1.0
      %v515 = vmax.f32 %v512, 1.0
      %v516 = vrcp.pop %v513
      %v517 = vmul.f32 1.0, %v516
      %v518 = vrcp.pop %v514
      %v519 = vmul.f32 1.0, %v518
      %v520 = vrcp.pop %v515
      %v521 = vmul.f32 1.0, %v520
      %v522 = vmul.f32 %v500, %v517
      %v523 = vmul.f32 %v501, %v519
      %v524 = vmul.f32 %v502, %v521
      %v525 = vlaneseq
      %v526 = vshrl.u32 %v525, 7
      %v527 = vsub.s32 1, %v526
      %v528 = vrot.slane %v275, %v527
      %vm529 = vcmp.eq.s32.totalorder %v487, %v528
      %vm530 = vcmp.eq.s32.totalorder %v488, %v528
      %vm531 = vcmp.eq.s32.totalorder %v489, %v528
      %v532 = vsel %vm529, 1, 0
      %v533 = vsel %vm530, 1, 0
      %v534 = vsel %vm531, 1, 0
      %v535 = vcvt.s32.f32 %v532
      %v536 = vcvt.s32.f32 %v533
      %v537 = vcvt.s32.f32 %v534
      %v538 = vsel %vm503, %v535, 0.0
      %539 = vadd.xlane.f32.xlu0 %v538
      %v540 = vpop.xlane.xlu0 %539
      %v541 = vsel %vm503, %v536, 0.0
      %542 = vadd.xlane.f32.xlu0 %v541
      %v543 = vpop.xlane.xlu0 %542
      %v544 = vsel %vm503, %v537, 0.0
      %545 = vadd.xlane.f32.xlu0 %v544
      %v546 = vpop.xlane.xlu0 %545
      %v547 = vmax.f32 %v540, 1.0
      %v548 = vmax.f32 %v543, 1.0
      %v549 = vmax.f32 %v546, 1.0
      %v550 = vrcp.pop %v547
      %v551 = vmul.f32 1.0, %v550
      %v552 = vrcp.pop %v548
      %v553 = vmul.f32 1.0, %v552
      %v554 = vrcp.pop %v549
      %v555 = vmul.f32 1.0, %v554
      %v556 = vmul.f32 %v535, %v551
      %v557 = vmul.f32 %v536, %v553
      %v558 = vmul.f32 %v537, %v555
      %v560 = vsel %vm503, %v522, 0
      %v563 = vsel %vm503, %v523, 0
      %v566 = vsel %vm503, %v524, 0
      %568 = vmatprep.subr.mxu0 0.0
      %569 = vmatpush1.msra.mxu0 %v438
      %570 = vmatprep.subr.mxu0 0.0
      %571 = vmatpush1.msra.mxu0 %v443
      %572 = vmatprep.subr.mxu0 0.0
      %573 = vmatpush1.msra.mxu0 %v448
      %574 = vmatprep.subr.mxu0 0.0
      %575 = vmatpush1.msra.mxu0 %v453
      %576 = vmatprep.subr.mxu0 0.0
      %577 = vmatpush1.msra.mxu0 %v458
      %578 = vmatprep.subr.mxu0 0.0
      %579 = vmatpush1.msra.mxu0 %v463
      %580 = vmatprep.subr.mxu0 0.0
      %581 = vmatpush1.msra.mxu0 %v468
      %582 = vmatprep.subr.mxu0 0.0
      %583 = vmatpush1.msra.mxu0 %v473
      %584 = vmatprep.subr.mxu0 0.0
      %585 = vmatpush1.msra.mxu0 %v478
      %586 = vmatprep.subr.mxu0 0.0
      %587 = vmatpush1.msra.mxu0 %v483
      %588 = vmatprep.subr.mxu0 0.0
      %589 = vmatpush1.msra.mxu0 0.0
      %590 = vmatprep.subr.mxu0 0.0
      %591 = vmatpush1.msra.mxu0 0.0
      %592 = vmatprep.subr.mxu0 0.0
      %593 = vmatpush1.msra.mxu0 0.0
      %594 = vmatprep.subr.mxu0 0.0
      %595 = vmatpush1.msra.mxu0 0.0
      %596 = vmatprep.subr.mxu0 0.0
      %597 = vmatpush1.msra.mxu0 0.0
      %598 = vmatprep.subr.mxu0 0.0
      %599 = vmatpush1.msra.mxu0 0.0
      %600 = vmatprep.subr.mxu0 0.0
      %601 = vmatpush1.msra.mxu0 0.0
      %602 = vmatprep.subr.mxu0 0.0
      %603 = vmatpush1.msra.mxu0 0.0
      %604 = vmatprep.subr.mxu0 0.0
      %605 = vmatpush1.msra.mxu0 0.0
      %606 = vmatprep.subr.mxu0 0.0
      %607 = vmatpush1.msra.mxu0 0.0
      %608 = vmatprep.subr.mxu0 0.0
      %609 = vmatpush1.msra.mxu0 0.0
      %610 = vmatprep.subr.mxu0 0.0
      %611 = vmatpush1.msra.mxu0 0.0
      %612 = vmatprep.subr.mxu0 0.0
      %613 = vmatpush1.msra.mxu0 0.0
      %614 = vmatprep.subr.mxu0 0.0
      %615 = vmatpush1.msra.mxu0 0.0
      %616 = vmatprep.subr.mxu0 0.0
      %617 = vmatpush1.msra.mxu0 0.0
      %618 = vmatprep.subr.mxu0 0.0
      %619 = vmatpush1.msra.mxu0 0.0
      %620 = vmatprep.subr.mxu0 0.0
      %621 = vmatpush1.msra.mxu0 0.0
      %622 = vmatprep.subr.mxu0 0.0
      %623 = vmatpush1.msra.mxu0 0.0
      %624 = vmatprep.subr.mxu0 0.0
      %625 = vmatpush1.msra.mxu0 0.0
      %626 = vmatprep.subr.mxu0 0.0
      %627 = vmatpush1.msra.mxu0 0.0
      %628 = vmatprep.subr.mxu0 0.0
      %629 = vmatpush1.msra.mxu0 0.0
      %630 = vmatprep.subr.mxu0 0.0
      %631 = vmatpush1.msra.mxu0 0.0
      %632 = vmatprep.mubr.f32.mxu0 0.0
      %633 = vmatmul.mubr.f32.gmra.mrb[0].mxu0 %v560
      %v634 = vpop.f32.mrb[0].mxu0
      %v635 = vadd.f32 0.0, %v634
      %v636 = vpop.f32.mrb[0].mxu0
      %637 = vmatprep.mubr.f32.mxu0 0.0
      %638 = vmatmul.mubr.f32.gmra.mrb[0].mxu0 %v563
      %v639 = vpop.f32.mrb[0].mxu0
      %v640 = vadd.f32 0.0, %v639
      %v641 = vpop.f32.mrb[0].mxu0
      %642 = vmatprep.mubr.f32.mxu0 0.0
      %643 = vmatmul.mubr.f32.gmra.mrb[0].mxu0 %v566
      %v644 = vpop.f32.mrb[0].mxu0
      %v645 = vadd.f32 0.0, %v644
      %v646 = vpop.f32.mrb[0].mxu0
      %647 = vdwg.mxu0
      %v649 = vsel %vm503, %v556, 0
      %v652 = vsel %vm503, %v557, 0
      %v655 = vsel %vm503, %v558, 0
      %657 = vmatprep.subr.mxu0 0.0
      %658 = vmatpush1.msra.mxu0 %v438
      %659 = vmatprep.subr.mxu0 0.0
      %660 = vmatpush1.msra.mxu0 %v443
      %661 = vmatprep.subr.mxu0 0.0
      %662 = vmatpush1.msra.mxu0 %v448
      %663 = vmatprep.subr.mxu0 0.0
      %664 = vmatpush1.msra.mxu0 %v453
      %665 = vmatprep.subr.mxu0 0.0
      %666 = vmatpush1.msra.mxu0 %v458
      %667 = vmatprep.subr.mxu0 0.0
      %668 = vmatpush1.msra.mxu0 %v463
      %669 = vmatprep.subr.mxu0 0.0
      %670 = vmatpush1.msra.mxu0 %v468
      %671 = vmatprep.subr.mxu0 0.0
      %672 = vmatpush1.msra.mxu0 %v473
      %673 = vmatprep.subr.mxu0 0.0
      %674 = vmatpush1.msra.mxu0 %v478
      %675 = vmatprep.subr.mxu0 0.0
      %676 = vmatpush1.msra.mxu0 %v483
      %677 = vmatprep.subr.mxu0 0.0
      %678 = vmatpush1.msra.mxu0 0.0
      %679 = vmatprep.subr.mxu0 0.0
      %680 = vmatpush1.msra.mxu0 0.0
      %681 = vmatprep.subr.mxu0 0.0
      %682 = vmatpush1.msra.mxu0 0.0
      %683 = vmatprep.subr.mxu0 0.0
      %684 = vmatpush1.msra.mxu0 0.0
      %685 = vmatprep.subr.mxu0 0.0
      %686 = vmatpush1.msra.mxu0 0.0
      %687 = vmatprep.subr.mxu0 0.0
      %688 = vmatpush1.msra.mxu0 0.0
      %689 = vmatprep.subr.mxu0 0.0
      %690 = vmatpush1.msra.mxu0 0.0
      %691 = vmatprep.subr.mxu0 0.0
      %692 = vmatpush1.msra.mxu0 0.0
      %693 = vmatprep.subr.mxu0 0.0
      %694 = vmatpush1.msra.mxu0 0.0
      %695 = vmatprep.subr.mxu0 0.0
      %696 = vmatpush1.msra.mxu0 0.0
      %697 = vmatprep.subr.mxu0 0.0
      %698 = vmatpush1.msra.mxu0 0.0
      %699 = vmatprep.subr.mxu0 0.0
      %700 = vmatpush1.msra.mxu0 0.0
      %701 = vmatprep.subr.mxu0 0.0
      %702 = vmatpush1.msra.mxu0 0.0
      %703 = vmatprep.subr.mxu0 0.0
      %704 = vmatpush1.msra.mxu0 0.0
      %705 = vmatprep.subr.mxu0 0.0
      %706 = vmatpush1.msra.mxu0 0.0
      %707 = vmatprep.subr.mxu0 0.0
      %708 = vmatpush1.msra.mxu0 0.0
      %709 = vmatprep.subr.mxu0 0.0
      %710 = vmatpush1.msra.mxu0 0.0
      %711 = vmatprep.subr.mxu0 0.0
      %712 = vmatpush1.msra.mxu0 0.0
      %713 = vmatprep.subr.mxu0 0.0
      %714 = vmatpush1.msra.mxu0 0.0
      %715 = vmatprep.subr.mxu0 0.0
      %716 = vmatpush1.msra.mxu0 0.0
      %717 = vmatprep.subr.mxu0 0.0
      %718 = vmatpush1.msra.mxu0 0.0
      %719 = vmatprep.subr.mxu0 0.0
      %720 = vmatpush1.msra.mxu0 0.0
      %721 = vmatprep.mubr.f32.mxu0 0.0
      %722 = vmatmul.mubr.f32.gmra.mrb[0].mxu0 %v649
      %v723 = vpop.f32.mrb[0].mxu0
      %v724 = vadd.f32 0.0, %v723
      %v725 = vpop.f32.mrb[0].mxu0
      %726 = vmatprep.mubr.f32.mxu0 0.0
      %727 = vmatmul.mubr.f32.gmra.mrb[0].mxu0 %v652
      %v728 = vpop.f32.mrb[0].mxu0
      %v729 = vadd.f32 0.0, %v728
      %v730 = vpop.f32.mrb[0].mxu0
      %731 = vmatprep.mubr.f32.mxu0 0.0
      %732 = vmatmul.mubr.f32.gmra.mrb[0].mxu0 %v655
      %v733 = vpop.f32.mrb[0].mxu0
      %v734 = vadd.f32 0.0, %v733
      %v735 = vpop.f32.mrb[0].mxu0
      %736 = vdwg.mxu0
      %740 = vrot.lane.b32.xlu0 %v724, 32
      %v741 = vpop.permute.xlu0 %740
      %742 = vrot.lane.b32.xlu0 %v729, 32
      %v743 = vpop.permute.xlu0 %742
      %744 = vrot.lane.b32.xlu0 %v734, 32
      %v745 = vpop.permute.xlu0 %744
      %752 = vrot.lane.b32.xlu0 %v260, 64
      %v753 = vpop.permute.xlu0 %752
      %754 = vrot.lane.b32.xlu0 %v261, 64
      %v755 = vpop.permute.xlu0 %754
      %756 = vrot.lane.b32.xlu0 %v262, 64
      %v757 = vpop.permute.xlu0 %756
      %vm761 = vcmask 261120
      %v762 = vsel %vm761, %v635, %v741
      %v763 = vsel %vm761, %v640, %v743
      %v764 = vsel %vm761, %v645, %v745
      %vm765 = vcmask 523264
      %v766 = vsel %vm765, %v762, %v753
      %v767 = vsel %vm765, %v763, %v755
      %v768 = vsel %vm765, %v764, %v757
      %v769 = vld [vmem:[%s3] sm:$0xff]
      %v770 = vld [vmem:[%s3 + $0x8] sm:$0xff]
      %v771 = vld [vmem:[%s3 + $0x10] sm:$0xff]
      %v772 = vld [vmem:[%s3 + $0x18] sm:$0xff]
      %v773 = vld [vmem:[%s3 + $0x20] sm:$0xff]
      %v774 = vld [vmem:[%s3 + $0x28] sm:$0xff]
      %v775 = vld [vmem:[%s3 + $0x30] sm:$0xff]
      %v776 = vld [vmem:[%s3 + $0x38] sm:$0xff]
      %v777 = vld [vmem:[%s3 + $0x40] sm:$0xff]
      %v778 = vld [vmem:[%s3 + $0x48] sm:$0xff]
      %v779 = vld [vmem:[%s3 + $0x50] sm:$0xff]
      %v780 = vld [vmem:[%s3 + $0x58] sm:$0xff]
      %v781 = vlaneseq
      %v782 = vshrl.u32 %v781, 7
      %v783 = vsub.s32 0, %v782
      %v784 = vrot.slane %v276, %v783
      %vm785 = vcmask 785408
      %v787 = vsel %vm785, %v766, 0
      %v790 = vsel %vm785, %v767, 0
      %v793 = vsel %vm785, %v768, 0
      %795 = vmatprep.subr.mxu0 0.0
      %796 = vmatpush1.msra.mxu0 %v769
      %797 = vmatprep.subr.mxu0 0.0
      %798 = vmatpush1.msra.mxu0 %v770
      %799 = vmatprep.subr.mxu0 0.0
      %800 = vmatpush1.msra.mxu0 %v771
      %801 = vmatprep.subr.mxu0 0.0
      %802 = vmatpush1.msra.mxu0 %v772
      %803 = vmatprep.subr.mxu0 0.0
      %804 = vmatpush1.msra.mxu0 %v773
      %805 = vmatprep.subr.mxu0 0.0
      %806 = vmatpush1.msra.mxu0 %v774
      %807 = vmatprep.subr.mxu0 0.0
      %808 = vmatpush1.msra.mxu0 %v775
      %809 = vmatprep.subr.mxu0 0.0
      %810 = vmatpush1.msra.mxu0 %v776
      %811 = vmatprep.subr.mxu0 0.0
      %812 = vmatpush1.msra.mxu0 %v777
      %813 = vmatprep.subr.mxu0 0.0
      %814 = vmatpush1.msra.mxu0 %v778
      %815 = vmatprep.subr.mxu0 0.0
      %816 = vmatpush1.msra.mxu0 %v779
      %817 = vmatprep.subr.mxu0 0.0
      %818 = vmatpush1.msra.mxu0 %v780
      %819 = vmatprep.subr.mxu0 0.0
      %820 = vmatpush1.msra.mxu0 0.0
      %821 = vmatprep.subr.mxu0 0.0
      %822 = vmatpush1.msra.mxu0 0.0
      %823 = vmatprep.subr.mxu0 0.0
      %824 = vmatpush1.msra.mxu0 0.0
      %825 = vmatprep.subr.mxu0 0.0
      %826 = vmatpush1.msra.mxu0 0.0
      %827 = vmatprep.subr.mxu0 0.0
      %828 = vmatpush1.msra.mxu0 0.0
      %829 = vmatprep.subr.mxu0 0.0
      %830 = vmatpush1.msra.mxu0 0.0
      %831 = vmatprep.subr.mxu0 0.0
      %832 = vmatpush1.msra.mxu0 0.0
      %833 = vmatprep.subr.mxu0 0.0
      %834 = vmatpush1.msra.mxu0 0.0
      %835 = vmatprep.subr.mxu0 0.0
      %836 = vmatpush1.msra.mxu0 0.0
      %837 = vmatprep.subr.mxu0 0.0
      %838 = vmatpush1.msra.mxu0 0.0
      %839 = vmatprep.subr.mxu0 0.0
      %840 = vmatpush1.msra.mxu0 0.0
      %841 = vmatprep.subr.mxu0 0.0
      %842 = vmatpush1.msra.mxu0 0.0
      %843 = vmatprep.subr.mxu0 0.0
      %844 = vmatpush1.msra.mxu0 0.0
      %845 = vmatprep.subr.mxu0 0.0
      %846 = vmatpush1.msra.mxu0 0.0
      %847 = vmatprep.subr.mxu0 0.0
      %848 = vmatpush1.msra.mxu0 0.0
      %849 = vmatprep.subr.mxu0 0.0
      %850 = vmatpush1.msra.mxu0 0.0
      %851 = vmatprep.subr.mxu0 0.0
      %852 = vmatpush1.msra.mxu0 0.0
      %853 = vmatprep.subr.mxu0 0.0
      %854 = vmatpush1.msra.mxu0 0.0
      %855 = vmatprep.subr.mxu0 0.0
      %856 = vmatpush1.msra.mxu0 0.0
      %857 = vmatprep.subr.mxu0 0.0
      %858 = vmatpush1.msra.mxu0 0.0
      %859 = vmatprep.mubr.f32.mxu0 0.0
      %860 = vmatmul.mubr.f32.gmra.mrb[0].mxu0 %v787
      %v861 = vpop.f32.mrb[0].mxu0
      %v862 = vadd.f32 %v784, %v861
      %v863 = vpop.f32.mrb[0].mxu0
      %864 = vmatprep.mubr.f32.mxu0 0.0
      %865 = vmatmul.mubr.f32.gmra.mrb[0].mxu0 %v790
      %v866 = vpop.f32.mrb[0].mxu0
      %v867 = vadd.f32 %v784, %v866
      %v868 = vpop.f32.mrb[0].mxu0
      %869 = vmatprep.mubr.f32.mxu0 0.0
      %870 = vmatmul.mubr.f32.gmra.mrb[0].mxu0 %v793
      %v871 = vpop.f32.mrb[0].mxu0
      %v872 = vpop.f32.mrb[0].mxu0
      %873 = vdwg.mxu0
      %v874 = vmax.f32 %v862, 0.0
      %v875 = vmax.f32 %v867, 0.0
      %876 = vset.pattern.permute.xlu0 1
      %877 = vperm.xlu0 %876, %v265
      %v878 = vpop.permute.xlu0 %877
      %879 = vset.pattern.permute.xlu0 1
      %880 = vperm.xlu0 %879, %v266
      %v881 = vpop.permute.xlu0 %880
      %882 = vset.pattern.permute.xlu0 1
      %883 = vperm.xlu0 %882, %v267
      %v884 = vpop.permute.xlu0 %883
      %885 = vset.pattern.permute.xlu0 1
      %886 = vperm.xlu0 %885, %v268
      %v887 = vpop.permute.xlu0 %886
      %888 = vset.pattern.permute.xlu0 1
      %889 = vperm.xlu0 %888, %v269
      %v890 = vpop.permute.xlu0 %889
      %891 = vset.pattern.permute.xlu0 1
      %892 = vperm.xlu0 %891, %v270
      %v893 = vpop.permute.xlu0 %892
      %894 = vset.pattern.permute.xlu0 1
      %895 = vperm.xlu0 %894, %v271
      %v896 = vpop.permute.xlu0 %895
      %897 = vset.pattern.permute.xlu0 1
      %898 = vperm.xlu0 %897, %v272
      %v899 = vpop.permute.xlu0 %898
      %900 = vset.pattern.permute.xlu0 1
      %901 = vperm.xlu0 %900, %v273
      %v902 = vpop.permute.xlu0 %901
      %903 = vset.pattern.permute.xlu0 1
      %904 = vperm.xlu0 %903, %v274
      %v905 = vpop.permute.xlu0 %904
      %vm906 = vcmp.eq.s32.totalorder %v279, %v878
      %vm907 = vcmp.eq.s32.totalorder %v279, %v881
      %vm908 = vcmp.eq.s32.totalorder %v279, %v884
      %vm909 = vcmp.eq.s32.totalorder %v279, %v887
      %vm910 = vcmp.eq.s32.totalorder %v279, %v890
      %vm911 = vcmp.eq.s32.totalorder %v279, %v893
      %vm912 = vcmp.eq.s32.totalorder %v279, %v896
      %vm913 = vcmp.eq.s32.totalorder %v279, %v899
      %vm914 = vcmp.eq.s32.totalorder %v279, %v902
      %vm915 = vcmp.eq.s32.totalorder %v279, %v905
      %v916 = vsel %vm906, 1, 0
      %v917 = vsel %vm907, 1, 0
      %v918 = vsel %vm908, 1, 0
      %v919 = vsel %vm909, 1, 0
      %v920 = vsel %vm910, 1, 0
      %v921 = vsel %vm911, 1, 0
      %v922 = vsel %vm912, 1, 0
      %v923 = vsel %vm913, 1, 0
      %v924 = vsel %vm914, 1, 0
      %v925 = vsel %vm915, 1, 0
      %v926 = vcvt.s32.f32 %v916
      %v927 = vcvt.s32.f32 %v917
      %v928 = vcvt.s32.f32 %v918
      %v929 = vcvt.s32.f32 %v919
      %v930 = vcvt.s32.f32 %v920
      %v931 = vcvt.s32.f32 %v921
      %v932 = vcvt.s32.f32 %v922
      %v933 = vcvt.s32.f32 %v923
      %v934 = vcvt.s32.f32 %v924
      %v935 = vcvt.s32.f32 %v925
      %938 = vrot.lane.b32.xlu0 %v874, 64
      %v939 = vpop.permute.xlu0 %938
      %940 = vrot.lane.b32.xlu0 %v875, 64
      %v941 = vpop.permute.xlu0 %940
      %vm944 = vcmask 130048
      %v946 = vsel %vm944, %v926, 0
      %v949 = vsel %vm944, %v927, 0
      %v952 = vsel %vm944, %v928, 0
      %v955 = vsel %vm944, %v929, 0
      %v958 = vsel %vm944, %v930, 0
      %v961 = vsel %vm944, %v931, 0
      %v964 = vsel %vm944, %v932, 0
      %v967 = vsel %vm944, %v933, 0
      %v970 = vsel %vm944, %v934, 0
      %v973 = vsel %vm944, %v935, 0
      %975 = vmatprep.subr.mxu0 0.0
      %976 = vmatpush1.msra.mxu0 %v939
      %977 = vmatprep.subr.mxu0 0.0
      %978 = vmatpush1.msra.mxu0 %v941
      %979 = vmatprep.subr.mxu0 0.0
      %980 = vmatpush1.msra.mxu0 0.0
      %981 = vmatprep.subr.mxu0 0.0
      %982 = vmatpush1.msra.mxu0 0.0
      %983 = vmatprep.subr.mxu0 0.0
      %984 = vmatpush1.msra.mxu0 0.0
      %985 = vmatprep.subr.mxu0 0.0
      %986 = vmatpush1.msra.mxu0 0.0
      %987 = vmatprep.subr.mxu0 0.0
      %988 = vmatpush1.msra.mxu0 0.0
      %989 = vmatprep.subr.mxu0 0.0
      %990 = vmatpush1.msra.mxu0 0.0
      %991 = vmatprep.subr.mxu0 0.0
      %992 = vmatpush1.msra.mxu0 0.0
      %993 = vmatprep.subr.mxu0 0.0
      %994 = vmatpush1.msra.mxu0 0.0
      %995 = vmatprep.subr.mxu0 0.0
      %996 = vmatpush1.msra.mxu0 0.0
      %997 = vmatprep.subr.mxu0 0.0
      %998 = vmatpush1.msra.mxu0 0.0
      %999 = vmatprep.subr.mxu0 0.0
      %1000 = vmatpush1.msra.mxu0 0.0
      %1001 = vmatprep.subr.mxu0 0.0
      %1002 = vmatpush1.msra.mxu0 0.0
      %1003 = vmatprep.subr.mxu0 0.0
      %1004 = vmatpush1.msra.mxu0 0.0
      %1005 = vmatprep.subr.mxu0 0.0
      %1006 = vmatpush1.msra.mxu0 0.0
      %1007 = vmatprep.subr.mxu0 0.0
      %1008 = vmatpush1.msra.mxu0 0.0
      %1009 = vmatprep.subr.mxu0 0.0
      %1010 = vmatpush1.msra.mxu0 0.0
      %1011 = vmatprep.subr.mxu0 0.0
      %1012 = vmatpush1.msra.mxu0 0.0
      %1013 = vmatprep.subr.mxu0 0.0
      %1014 = vmatpush1.msra.mxu0 0.0
      %1015 = vmatprep.subr.mxu0 0.0
      %1016 = vmatpush1.msra.mxu0 0.0
      %1017 = vmatprep.subr.mxu0 0.0
      %1018 = vmatpush1.msra.mxu0 0.0
      %1019 = vmatprep.subr.mxu0 0.0
      %1020 = vmatpush1.msra.mxu0 0.0
      %1021 = vmatprep.subr.mxu0 0.0
      %1022 = vmatpush1.msra.mxu0 0.0
      %1023 = vmatprep.subr.mxu0 0.0
      %1024 = vmatpush1.msra.mxu0 0.0
      %1025 = vmatprep.subr.mxu0 0.0
      %1026 = vmatpush1.msra.mxu0 0.0
      %1027 = vmatprep.subr.mxu0 0.0
      %1028 = vmatpush1.msra.mxu0 0.0
      %1029 = vmatprep.subr.mxu0 0.0
      %1030 = vmatpush1.msra.mxu0 0.0
      %1031 = vmatprep.subr.mxu0 0.0
      %1032 = vmatpush1.msra.mxu0 0.0
      %1033 = vmatprep.subr.mxu0 0.0
      %1034 = vmatpush1.msra.mxu0 0.0
      %1035 = vmatprep.subr.mxu0 0.0
      %1036 = vmatpush1.msra.mxu0 0.0
      %1037 = vmatprep.subr.mxu0 0.0
      %1038 = vmatpush1.msra.mxu0 0.0
      %1039 = vmatprep.mubr.f32.mxu0 0.0
      %1040 = vmatmul.mubr.f32.gmra.mrb[0].mxu0 %v946
      %v1041 = vpop.f32.mrb[0].mxu0
      %v1042 = vadd.f32 0.0, %v1041
      %v1043 = vpop.f32.mrb[0].mxu0
      %1044 = vmatprep.mubr.f32.mxu0 0.0
      %1045 = vmatmul.mubr.f32.gmra.mrb[0].mxu0 %v949
      %v1046 = vpop.f32.mrb[0].mxu0
      %v1047 = vadd.f32 0.0, %v1046
      %v1048 = vpop.f32.mrb[0].mxu0
      %1049 = vmatprep.mubr.f32.mxu0 0.0
      %1050 = vmatmul.mubr.f32.gmra.mrb[0].mxu0 %v952
      %v1051 = vpop.f32.mrb[0].mxu0
      %v1052 = vadd.f32 0.0, %v1051
      %v1053 = vpop.f32.mrb[0].mxu0
      %1054 = vmatprep.mubr.f32.mxu0 0.0
      %1055 = vmatmul.mubr.f32.gmra.mrb[0].mxu0 %v955
      %v1056 = vpop.f32.mrb[0].mxu0
      %v1057 = vadd.f32 0.0, %v1056
      %v1058 = vpop.f32.mrb[0].mxu0
      %1059 = vmatprep.mubr.f32.mxu0 0.0
      %1060 = vmatmul.mubr.f32.gmra.mrb[0].mxu0 %v958
      %v1061 = vpop.f32.mrb[0].mxu0
      %v1062 = vadd.f32 0.0, %v1061
      %v1063 = vpop.f32.mrb[0].mxu0
      %1064 = vmatprep.mubr.f32.mxu0 0.0
      %1065 = vmatmul.mubr.f32.gmra.mrb[0].mxu0 %v961
      %v1066 = vpop.f32.mrb[0].mxu0
      %v1067 = vadd.f32 0.0, %v1066
      %v1068 = vpop.f32.mrb[0].mxu0
      %1069 = vmatprep.mubr.f32.mxu0 0.0
      %1070 = vmatmul.mubr.f32.gmra.mrb[0].mxu0 %v964
      %v1071 = vpop.f32.mrb[0].mxu0
      %v1072 = vadd.f32 0.0, %v1071
      %v1073 = vpop.f32.mrb[0].mxu0
      %1074 = vmatprep.mubr.f32.mxu0 0.0
      %1075 = vmatmul.mubr.f32.gmra.mrb[0].mxu0 %v967
      %v1076 = vpop.f32.mrb[0].mxu0
      %v1077 = vadd.f32 0.0, %v1076
      %v1078 = vpop.f32.mrb[0].mxu0
      %1079 = vmatprep.mubr.f32.mxu0 0.0
      %1080 = vmatmul.mubr.f32.gmra.mrb[0].mxu0 %v970
      %v1081 = vpop.f32.mrb[0].mxu0
      %v1082 = vadd.f32 0.0, %v1081
      %v1083 = vpop.f32.mrb[0].mxu0
      %1084 = vmatprep.mubr.f32.mxu0 0.0
      %1085 = vmatmul.mubr.f32.gmra.mrb[0].mxu0 %v973
      %v1086 = vpop.f32.mrb[0].mxu0
      %v1087 = vadd.f32 0.0, %v1086
      %v1088 = vpop.f32.mrb[0].mxu0
      %1089 = vdwg.mxu0
      %v1090 = vlaneseq
      %v1091 = vshrl.u32 %v1090, 7
      %v1092 = vsub.s32 2, %v1091
      %v1093 = vrot.slane %v275, %v1092
      %vm1094 = vcmp.eq.s32.totalorder %v487, %v1093
      %vm1095 = vcmp.eq.s32.totalorder %v488, %v1093
      %v1096 = vsel %vm1094, 1, 0
      %v1097 = vsel %vm1095, 1, 0
      %v1098 = vcvt.s32.f32 %v1096
      %v1099 = vcvt.s32.f32 %v1097
      %v1100 = vsel %vm503, %v1098, 0.0
      %1101 = vadd.xlane.f32.xlu0 %v1100
      %v1102 = vpop.xlane.xlu0 %1101
      %v1103 = vsel %vm503, %v1099, 0.0
      %1104 = vadd.xlane.f32.xlu0 %v1103
      %v1105 = vpop.xlane.xlu0 %1104
      %v1106 = vmax.f32 %v1102, 1.0
      %v1107 = vmax.f32 %v1105, 1.0
      %v1108 = vrcp.pop %v1106
      %v1109 = vmul.f32 1.0, %v1108
      %v1110 = vrcp.pop %v1107
      %v1111 = vmul.f32 1.0, %v1110
      %v1112 = vmul.f32 %v1098, %v1109
      %v1113 = vmul.f32 %v1099, %v1111
      %v1115 = vsel %vm503, %v1112, 0
      %v1118 = vsel %vm503, %v1113, 0
      %1120 = vmatprep.subr.mxu0 0.0
      %1121 = vmatpush1.msra.mxu0 %v1042
      %1122 = vmatprep.subr.mxu0 0.0
      %1123 = vmatpush1.msra.mxu0 %v1047
      %1124 = vmatprep.subr.mxu0 0.0
      %1125 = vmatpush1.msra.mxu0 %v1052
      %1126 = vmatprep.subr.mxu0 0.0
      %1127 = vmatpush1.msra.mxu0 %v1057
      %1128 = vmatprep.subr.mxu0 0.0
      %1129 = vmatpush1.msra.mxu0 %v1062
      %1130 = vmatprep.subr.mxu0 0.0
      %1131 = vmatpush1.msra.mxu0 %v1067
      %1132 = vmatprep.subr.mxu0 0.0
      %1133 = vmatpush1.msra.mxu0 %v1072
      %1134 = vmatprep.subr.mxu0 0.0
      %1135 = vmatpush1.msra.mxu0 %v1077
      %1136 = vmatprep.subr.mxu0 0.0
      %1137 = vmatpush1.msra.mxu0 %v1082
      %1138 = vmatprep.subr.mxu0 0.0
      %1139 = vmatpush1.msra.mxu0 %v1087
      %1140 = vmatprep.subr.mxu0 0.0
      %1141 = vmatpush1.msra.mxu0 0.0
      %1142 = vmatprep.subr.mxu0 0.0
      %1143 = vmatpush1.msra.mxu0 0.0
      %1144 = vmatprep.subr.mxu0 0.0
      %1145 = vmatpush1.msra.mxu0 0.0
      %1146 = vmatprep.subr.mxu0 0.0
      %1147 = vmatpush1.msra.mxu0 0.0
      %1148 = vmatprep.subr.mxu0 0.0
      %1149 = vmatpush1.msra.mxu0 0.0
      %1150 = vmatprep.subr.mxu0 0.0
      %1151 = vmatpush1.msra.mxu0 0.0
      %1152 = vmatprep.subr.mxu0 0.0
      %1153 = vmatpush1.msra.mxu0 0.0
      %1154 = vmatprep.subr.mxu0 0.0
      %1155 = vmatpush1.msra.mxu0 0.0
      %1156 = vmatprep.subr.mxu0 0.0
      %1157 = vmatpush1.msra.mxu0 0.0
      %1158 = vmatprep.subr.mxu0 0.0
      %1159 = vmatpush1.msra.mxu0 0.0
      %1160 = vmatprep.subr.mxu0 0.0
      %1161 = vmatpush1.msra.mxu0 0.0
      %1162 = vmatprep.subr.mxu0 0.0
      %1163 = vmatpush1.msra.mxu0 0.0
      %1164 = vmatprep.subr.mxu0 0.0
      %1165 = vmatpush1.msra.mxu0 0.0
      %1166 = vmatprep.subr.mxu0 0.0
      %1167 = vmatpush1.msra.mxu0 0.0
      %1168 = vmatprep.subr.mxu0 0.0
      %1169 = vmatpush1.msra.mxu0 0.0
      %1170 = vmatprep.subr.mxu0 0.0
      %1171 = vmatpush1.msra.mxu0 0.0
      %1172 = vmatprep.subr.mxu0 0.0
      %1173 = vmatpush1.msra.mxu0 0.0
      %1174 = vmatprep.subr.mxu0 0.0
      %1175 = vmatpush1.msra.mxu0 0.0
      %1176 = vmatprep.subr.mxu0 0.0
      %1177 = vmatpush1.msra.mxu0 0.0
      %1178 = vmatprep.subr.mxu0 0.0
      %1179 = vmatpush1.msra.mxu0 0.0
      %1180 = vmatprep.subr.mxu0 0.0
      %1181 = vmatpush1.msra.mxu0 0.0
      %1182 = vmatprep.subr.mxu0 0.0
      %1183 = vmatpush1.msra.mxu0 0.0
      %1184 = vmatprep.mubr.f32.mxu0 0.0
      %1185 = vmatmul.mubr.f32.gmra.mrb[0].mxu0 %v1115
      %v1186 = vpop.f32.mrb[0].mxu0
      %v1187 = vadd.f32 0.0, %v1186
      %v1188 = vpop.f32.mrb[0].mxu0
      %1189 = vmatprep.mubr.f32.mxu0 0.0
      %1190 = vmatmul.mubr.f32.gmra.mrb[0].mxu0 %v1118
      %v1191 = vpop.f32.mrb[0].mxu0
      %v1192 = vadd.f32 0.0, %v1191
      %v1193 = vpop.f32.mrb[0].mxu0
      %1194 = vdwg.mxu0
      %v1195 = vsel %vm944, %v263, 0.0
      %1196 = vadd.xlane.f32.xlu0 %v1195
      %v1197 = vpop.xlane.xlu0 %1196
      %v1198 = vsel %vm944, %v264, 0.0
      %1199 = vadd.xlane.f32.xlu0 %v1198
      %v1200 = vpop.xlane.xlu0 %1199
      %v1201 = vmax.f32 %v1197, 1.0
      %v1202 = vmax.f32 %v1200, 1.0
      %v1203 = vrcp.pop %v1201
      %v1204 = vmul.f32 1.0, %v1203
      %v1205 = vrcp.pop %v1202
      %v1206 = vmul.f32 1.0, %v1205
      %v1207 = vmul.f32 %v263, %v1204
      %v1208 = vmul.f32 %v264, %v1206
      %v1210 = vsel %vm944, %v1207, 0
      %v1213 = vsel %vm944, %v1208, 0
      %1215 = vmatprep.subr.mxu0 0.0
      %1216 = vmatpush1.msra.mxu0 %v874
      %1217 = vmatprep.subr.mxu0 0.0
      %1218 = vmatpush1.msra.mxu0 %v875
      %1219 = vmatprep.subr.mxu0 0.0
      %1220 = vmatpush1.msra.mxu0 0.0
      %1221 = vmatprep.subr.mxu0 0.0
      %1222 = vmatpush1.msra.mxu0 0.0
      %1223 = vmatprep.subr.mxu0 0.0
      %1224 = vmatpush1.msra.mxu0 0.0
      %1225 = vmatprep.subr.mxu0 0.0
      %1226 = vmatpush1.msra.mxu0 0.0
      %1227 = vmatprep.subr.mxu0 0.0
      %1228 = vmatpush1.msra.mxu0 0.0
      %1229 = vmatprep.subr.mxu0 0.0
      %1230 = vmatpush1.msra.mxu0 0.0
      %1231 = vmatprep.subr.mxu0 0.0
      %1232 = vmatpush1.msra.mxu0 0.0
      %1233 = vmatprep.subr.mxu0 0.0
      %1234 = vmatpush1.msra.mxu0 0.0
      %1235 = vmatprep.subr.mxu0 0.0
      %1236 = vmatpush1.msra.mxu0 0.0
      %1237 = vmatprep.subr.mxu0 0.0
      %1238 = vmatpush1.msra.mxu0 0.0
      %1239 = vmatprep.subr.mxu0 0.0
      %1240 = vmatpush1.msra.mxu0 0.0
      %1241 = vmatprep.subr.mxu0 0.0
      %1242 = vmatpush1.msra.mxu0 0.0
      %1243 = vmatprep.subr.mxu0 0.0
      %1244 = vmatpush1.msra.mxu0 0.0
      %1245 = vmatprep.subr.mxu0 0.0
      %1246 = vmatpush1.msra.mxu0 0.0
      %1247 = vmatprep.subr.mxu0 0.0
      %1248 = vmatpush1.msra.mxu0 0.0
      %1249 = vmatprep.subr.mxu0 0.0
      %1250 = vmatpush1.msra.mxu0 0.0
      %1251 = vmatprep.subr.mxu0 0.0
      %1252 = vmatpush1.msra.mxu0 0.0
      %1253 = vmatprep.subr.mxu0 0.0
      %1254 = vmatpush1.msra.mxu0 0.0
      %1255 = vmatprep.subr.mxu0 0.0
      %1256 = vmatpush1.msra.mxu0 0.0
      %1257 = vmatprep.subr.mxu0 0.0
      %1258 = vmatpush1.msra.mxu0 0.0
      %1259 = vmatprep.subr.mxu0 0.0
      %1260 = vmatpush1.msra.mxu0 0.0
      %1261 = vmatprep.subr.mxu0 0.0
      %1262 = vmatpush1.msra.mxu0 0.0
      %1263 = vmatprep.subr.mxu0 0.0
      %1264 = vmatpush1.msra.mxu0 0.0
      %1265 = vmatprep.subr.mxu0 0.0
      %1266 = vmatpush1.msra.mxu0 0.0
      %1267 = vmatprep.subr.mxu0 0.0
      %1268 = vmatpush1.msra.mxu0 0.0
      %1269 = vmatprep.subr.mxu0 0.0
      %1270 = vmatpush1.msra.mxu0 0.0
      %1271 = vmatprep.subr.mxu0 0.0
      %1272 = vmatpush1.msra.mxu0 0.0
      %1273 = vmatprep.subr.mxu0 0.0
      %1274 = vmatpush1.msra.mxu0 0.0
      %1275 = vmatprep.subr.mxu0 0.0
      %1276 = vmatpush1.msra.mxu0 0.0
      %1277 = vmatprep.subr.mxu0 0.0
      %1278 = vmatpush1.msra.mxu0 0.0
      %1279 = vmatprep.mubr.f32.mxu0 0.0
      %1280 = vmatmul.mubr.f32.gmra.mrb[0].mxu0 %v1210
      %v1281 = vpop.f32.mrb[0].mxu0
      %v1282 = vadd.f32 0.0, %v1281
      %v1283 = vpop.f32.mrb[0].mxu0
      %1284 = vmatprep.mubr.f32.mxu0 0.0
      %1285 = vmatmul.mubr.f32.gmra.mrb[0].mxu0 %v1213
      %v1286 = vpop.f32.mrb[0].mxu0
      %v1287 = vadd.f32 0.0, %v1286
      %v1288 = vpop.f32.mrb[0].mxu0
      %1289 = vdwg.mxu0
      %v1290 = vsel %vm765, %v1187, %v874
      %v1291 = vsel %vm765, %v1192, %v875
      %v1292 = vsel %vm765, %v1282, %v939
      %v1293 = vsel %vm765, %v1287, %v941
      %v1294 = vld [vmem:[%s3 + $0x60] sm:$0xff]
      %v1295 = vld [vmem:[%s3 + $0x68] sm:$0xff]
      %v1296 = vld [vmem:[%s3 + $0x70] sm:$0xff]
      %v1297 = vld [vmem:[%s3 + $0x78] sm:$0xff]
      %v1298 = vld [vmem:[%s3 + $0x80] sm:$0xff]
      %v1299 = vld [vmem:[%s3 + $0x88] sm:$0xff]
      %v1300 = vld [vmem:[%s3 + $0x90] sm:$0xff]
      %v1301 = vld [vmem:[%s3 + $0x98] sm:$0xff]
      %v1302 = vld [vmem:[%s3 + $0xa0] sm:$0xff]
      %v1303 = vld [vmem:[%s3 + $0xa8] sm:$0xff]
      %v1304 = vld [vmem:[%s3 + $0xb0] sm:$0xff]
      %v1305 = vld [vmem:[%s3 + $0xb8] sm:$0xff]
      %v1306 = vld [vmem:[%s3 + $0xc0] sm:$0xff]
      %v1307 = vld [vmem:[%s3 + $0xc8] sm:$0xff]
      %v1308 = vld [vmem:[%s3 + $0xd0] sm:$0xff]
      %v1309 = vld [vmem:[%s3 + $0xd8] sm:$0xff]
      %v1310 = vld [vmem:[%s3 + $0xe0] sm:$0xff]
      %v1311 = vld [vmem:[%s3 + $0xe8] sm:$0xff]
      %v1312 = vld [vmem:[%s3 + $0xf0] sm:$0xff]
      %v1313 = vld [vmem:[%s3 + $0xf8] sm:$0xff]
      %v1314 = vld [vmem:[%s3 + $0x100] sm:$0xff]
      %v1315 = vld [vmem:[%s3 + $0x108] sm:$0xff]
      %v1316 = vld [vmem:[%s3 + $0x110] sm:$0xff]
      %v1317 = vld [vmem:[%s3 + $0x118] sm:$0xff]
      %v1318 = vld [vmem:[%s3 + $0x120] sm:$0xff]
      %v1319 = vld [vmem:[%s3 + $0x128] sm:$0xff]
      %v1320 = vld [vmem:[%s3 + $0x130] sm:$0xff]
      %v1321 = vld [vmem:[%s3 + $0x138] sm:$0xff]
      %v1322 = vld [vmem:[%s3 + $0x140] sm:$0xff]
      %v1323 = vld [vmem:[%s3 + $0x148] sm:$0xff]
      %v1324 = vld [vmem:[%s3 + $0x150] sm:$0xff]
      %v1325 = vld [vmem:[%s3 + $0x158] sm:$0xff]
      %v1326 = vlaneseq
      %v1327 = vshrl.u32 %v1326, 7
      %v1328 = vsub.s32 1, %v1327
      %v1329 = vrot.slane %v276, %v1328
      %1330 = vmatprep.subr.mxu0 0.0
      %1331 = vmatpush1.msra.mxu0 %v1294
      %1332 = vmatprep.subr.mxu0 0.0
      %1333 = vmatpush1.msra.mxu0 %v1295
      %1334 = vmatprep.subr.mxu0 0.0
      %1335 = vmatpush1.msra.mxu0 %v1296
      %1336 = vmatprep.subr.mxu0 0.0
      %1337 = vmatpush1.msra.mxu0 %v1297
      %1338 = vmatprep.subr.mxu0 0.0
      %1339 = vmatpush1.msra.mxu0 %v1298
      %1340 = vmatprep.subr.mxu0 0.0
      %1341 = vmatpush1.msra.mxu0 %v1299
      %1342 = vmatprep.subr.mxu0 0.0
      %1343 = vmatpush1.msra.mxu0 %v1300
      %1344 = vmatprep.subr.mxu0 0.0
      %1345 = vmatpush1.msra.mxu0 %v1301
      %1346 = vmatprep.subr.mxu0 0.0
      %1347 = vmatpush1.msra.mxu0 %v1302
      %1348 = vmatprep.subr.mxu0 0.0
      %1349 = vmatpush1.msra.mxu0 %v1303
      %1350 = vmatprep.subr.mxu0 0.0
      %1351 = vmatpush1.msra.mxu0 %v1304
      %1352 = vmatprep.subr.mxu0 0.0
      %1353 = vmatpush1.msra.mxu0 %v1305
      %1354 = vmatprep.subr.mxu0 0.0
      %1355 = vmatpush1.msra.mxu0 %v1306
      %1356 = vmatprep.subr.mxu0 0.0
      %1357 = vmatpush1.msra.mxu0 %v1307
      %1358 = vmatprep.subr.mxu0 0.0
      %1359 = vmatpush1.msra.mxu0 %v1308
      %1360 = vmatprep.subr.mxu0 0.0
      %1361 = vmatpush1.msra.mxu0 %v1309
      %1362 = vmatprep.subr.mxu0 0.0
      %1363 = vmatpush1.msra.mxu0 %v1310
      %1364 = vmatprep.subr.mxu0 0.0
      %1365 = vmatpush1.msra.mxu0 %v1311
      %1366 = vmatprep.subr.mxu0 0.0
      %1367 = vmatpush1.msra.mxu0 %v1312
      %1368 = vmatprep.subr.mxu0 0.0
      %1369 = vmatpush1.msra.mxu0 %v1313
      %1370 = vmatprep.subr.mxu0 0.0
      %1371 = vmatpush1.msra.mxu0 %v1314
      %1372 = vmatprep.subr.mxu0 0.0
      %1373 = vmatpush1.msra.mxu0 %v1315
      %1374 = vmatprep.subr.mxu0 0.0
      %1375 = vmatpush1.msra.mxu0 %v1316
      %1376 = vmatprep.subr.mxu0 0.0
      %1377 = vmatpush1.msra.mxu0 %v1317
      %1378 = vmatprep.subr.mxu0 0.0
      %1379 = vmatpush1.msra.mxu0 %v1318
      %1380 = vmatprep.subr.mxu0 0.0
      %1381 = vmatpush1.msra.mxu0 %v1319
      %1382 = vmatprep.subr.mxu0 0.0
      %1383 = vmatpush1.msra.mxu0 %v1320
      %1384 = vmatprep.subr.mxu0 0.0
      %1385 = vmatpush1.msra.mxu0 %v1321
      %1386 = vmatprep.subr.mxu0 0.0
      %1387 = vmatpush1.msra.mxu0 %v1322
      %1388 = vmatprep.subr.mxu0 0.0
      %1389 = vmatpush1.msra.mxu0 %v1323
      %1390 = vmatprep.subr.mxu0 0.0
      %1391 = vmatpush1.msra.mxu0 %v1324
      %1392 = vmatprep.subr.mxu0 0.0
      %1393 = vmatpush1.msra.mxu0 %v1325
      %1394 = vmatprep.mubr.f32.mxu0 %v1292
      %1395 = vmatmul.mubr.f32.gmra.mrb[0].mxu0 %v1290
      %v1396 = vpop.f32.mrb[0].mxu0
      %v1397 = vadd.f32 %v1329, %v1396
      %v1398 = vpop.f32.mrb[0].mxu0
      %1399 = vmatprep.mubr.f32.mxu0 %v1293
      %1400 = vmatmul.mubr.f32.gmra.mrb[0].mxu0 %v1291
      %v1401 = vpop.f32.mrb[0].mxu0
      %v1402 = vadd.f32 %v1329, %v1401
      %v1403 = vpop.f32.mrb[0].mxu0
      %1404 = vdwg.mxu0
      %v1405 = vmax.f32 %v1397, 0.0
      %v1406 = vmax.f32 %v1402, 0.0
      %vm1407 = vcmask 1048064
      %v1408 = vsel %vm1407, %v1405, 0.0
      %v1409 = vsel %vm1407, %v1406, 0.0
      %v1410 = vadd.f32 %v1408, %v1409
      %v1411 = vrot.slane %v1410, 4
      %v1412 = vadd.f32 %v1410, %v1411
      %v1413 = vrot.slane %v1412, 2
      %v1414 = vadd.f32 %v1412, %v1413
      %v1415 = vrot.slane %v1414, 1
      %v1416 = vadd.f32 %v1414, %v1415
      %v1417 = vrcp.pop 16.0
      %v1418 = vmul.f32 %v1416, %v1417
      %v1419 = vsub.f32 %v1405, %v1418
      %v1420 = vsub.f32 %v1406, %v1418
      %v1421 = vmul.f32 %v1419, %v1419
      %v1422 = vmul.f32 %v1420, %v1420
      %v1423 = vsel %vm1407, %v1421, 0.0
      %v1424 = vsel %vm1407, %v1422, 0.0
      %v1425 = vadd.f32 %v1423, %v1424
      %v1426 = vrot.slane %v1425, 4
      %v1427 = vadd.f32 %v1425, %v1426
      %v1428 = vrot.slane %v1427, 2
      %v1429 = vadd.f32 %v1427, %v1428
      %v1430 = vrot.slane %v1429, 1
      %v1431 = vadd.f32 %v1429, %v1430
      %v1432 = vmul.f32 %v1431, %v1417
      %v1433 = vadd.f32 %v1432, 1e-05
      %v1434 = vrsqrt.pop %v1433
      %v1435 = vmul.f32 %v1419, %v1434
      %v1436 = vmul.f32 %v1420, %v1434
      %v1437 = vlaneseq
      %v1438 = vshrl.u32 %v1437, 7
      %v1439 = vsub.s32 2, %v1438
      %v1440 = vrot.slane %v276, %v1439
      %1442 = vrot.lane.b32.xlu0 %v1440, 64
      %v1443 = vpop.permute.xlu0 %1442
      %v1445 = vmul.f32 %v1435, %v1443
      %v1446 = vmul.f32 %v1436, %v1443
      %v1447 = vlaneseq
      %v1448 = vshrl.u32 %v1447, 7
      %v1449 = vsub.s32 3, %v1448
      %v1450 = vrot.slane %v276, %v1449
      %1452 = vrot.lane.b32.xlu0 %v1450, 64
      %v1453 = vpop.permute.xlu0 %1452
      %v1455 = vadd.f32 %v1445, %v1453
      %v1456 = vadd.f32 %v1446, %v1453
      %v1457 = vsel %vm1407, %v1455, 0.0
      %v1458 = vsel %vm1407, %v1456, 0.0
      %v1459 = vadd.f32 %v1457, %v1458
      %v1460 = vrot.slane %v1459, 4
      %v1461 = vadd.f32 %v1459, %v1460
      %v1462 = vrot.slane %v1461, 2
      %v1463 = vadd.f32 %v1461, %v1462
      %v1464 = vrot.slane %v1463, 1
      %v1465 = vadd.f32 %v1463, %v1464
      %v1466 = vmul.f32 %v1465, %v1417
      %v1467 = vld [vmem:[%s3 + $0x160] sm:$0xff]
      %v1468 = vld [vmem:[%s3 + $0x168] sm:$0xff]
      %v1469 = vld [vmem:[%s3 + $0x170] sm:$0xff]
      %v1470 = vld [vmem:[%s3 + $0x178] sm:$0xff]
      %v1471 = vld [vmem:[%s3 + $0x180] sm:$0xff]
      %v1472 = vld [vmem:[%s3 + $0x188] sm:$0xff]
      %v1473 = vld [vmem:[%s3 + $0x190] sm:$0xff]
      %v1474 = vld [vmem:[%s3 + $0x198] sm:$0xff]
      %1476 = vrot.lane.b32.xlu0 %v1466, 64
      %v1477 = vpop.permute.xlu0 %1476
      %v1479 = vrot.slane %v276, 4
      %v1481 = vsel %vm765, %v1477, 0
      %1483 = vmatprep.subr.mxu0 0.0
      %1484 = vmatpush1.msra.mxu0 %v1467
      %1485 = vmatprep.subr.mxu0 0.0
      %1486 = vmatpush1.msra.mxu0 %v1468
      %1487 = vmatprep.subr.mxu0 0.0
      %1488 = vmatpush1.msra.mxu0 %v1469
      %1489 = vmatprep.subr.mxu0 0.0
      %1490 = vmatpush1.msra.mxu0 %v1470
      %1491 = vmatprep.subr.mxu0 0.0
      %1492 = vmatpush1.msra.mxu0 %v1471
      %1493 = vmatprep.subr.mxu0 0.0
      %1494 = vmatpush1.msra.mxu0 %v1472
      %1495 = vmatprep.subr.mxu0 0.0
      %1496 = vmatpush1.msra.mxu0 %v1473
      %1497 = vmatprep.subr.mxu0 0.0
      %1498 = vmatpush1.msra.mxu0 %v1474
      %1499 = vmatprep.subr.mxu0 0.0
      %1500 = vmatpush1.msra.mxu0 0.0
      %1501 = vmatprep.subr.mxu0 0.0
      %1502 = vmatpush1.msra.mxu0 0.0
      %1503 = vmatprep.subr.mxu0 0.0
      %1504 = vmatpush1.msra.mxu0 0.0
      %1505 = vmatprep.subr.mxu0 0.0
      %1506 = vmatpush1.msra.mxu0 0.0
      %1507 = vmatprep.subr.mxu0 0.0
      %1508 = vmatpush1.msra.mxu0 0.0
      %1509 = vmatprep.subr.mxu0 0.0
      %1510 = vmatpush1.msra.mxu0 0.0
      %1511 = vmatprep.subr.mxu0 0.0
      %1512 = vmatpush1.msra.mxu0 0.0
      %1513 = vmatprep.subr.mxu0 0.0
      %1514 = vmatpush1.msra.mxu0 0.0
      %1515 = vmatprep.subr.mxu0 0.0
      %1516 = vmatpush1.msra.mxu0 0.0
      %1517 = vmatprep.subr.mxu0 0.0
      %1518 = vmatpush1.msra.mxu0 0.0
      %1519 = vmatprep.subr.mxu0 0.0
      %1520 = vmatpush1.msra.mxu0 0.0
      %1521 = vmatprep.subr.mxu0 0.0
      %1522 = vmatpush1.msra.mxu0 0.0
      %1523 = vmatprep.subr.mxu0 0.0
      %1524 = vmatpush1.msra.mxu0 0.0
      %1525 = vmatprep.subr.mxu0 0.0
      %1526 = vmatpush1.msra.mxu0 0.0
      %1527 = vmatprep.subr.mxu0 0.0
      %1528 = vmatpush1.msra.mxu0 0.0
      %1529 = vmatprep.subr.mxu0 0.0
      %1530 = vmatpush1.msra.mxu0 0.0
      %1531 = vmatprep.subr.mxu0 0.0
      %1532 = vmatpush1.msra.mxu0 0.0
      %1533 = vmatprep.subr.mxu0 0.0
      %1534 = vmatpush1.msra.mxu0 0.0
      %1535 = vmatprep.subr.mxu0 0.0
      %1536 = vmatpush1.msra.mxu0 0.0
      %1537 = vmatprep.subr.mxu0 0.0
      %1538 = vmatpush1.msra.mxu0 0.0
      %1539 = vmatprep.subr.mxu0 0.0
      %1540 = vmatpush1.msra.mxu0 0.0
      %1541 = vmatprep.subr.mxu0 0.0
      %1542 = vmatpush1.msra.mxu0 0.0
      %1543 = vmatprep.subr.mxu0 0.0
      %1544 = vmatpush1.msra.mxu0 0.0
      %1545 = vmatprep.subr.mxu0 0.0
      %1546 = vmatpush1.msra.mxu0 0.0
      %1547 = vmatprep.mubr.f32.mxu0 0.0
      %1548 = vmatmul.mubr.f32.gmra.mrb[0].mxu0 %v1481
      %v1549 = vpop.f32.mrb[0].mxu0
      %v1550 = vadd.f32 %v1479, %v1549
      %v1551 = vpop.f32.mrb[0].mxu0
      %1552 = vdwg.mxu0
      %v1553 = vlaneseq
      %v1554 = vshrl.u32 %v1553, 7
      %v1555 = vsub.s32 0, %v1554
      %v1556 = vrot.slane %v1550, %v1555
      %v1557 = vmul.f32 %v1397, %v1556
      %v1558 = vmul.f32 %v1402, %v1556
      %v1559 = vmul.f32 %v1557, %v1557
      %v1560 = vmul.f32 %v1558, %v1558
      %v1561 = vsel %vm765, %v1559, 0.0
      %1562 = vadd.xlane.f32.xlu0 %v1561
      %v1563 = vpop.xlane.xlu0 %1562
      %v1564 = vsel %vm765, %v1560, 0.0
      %1565 = vadd.xlane.f32.xlu0 %v1564
      %v1566 = vpop.xlane.xlu0 %1565
      %v1567 = vmax.f32 %v1563, 1e-24
      %v1568 = vmax.f32 %v1566, 1e-24
      %v1569 = vrsqrt.pop %v1567
      %v1570 = vrsqrt.pop %v1568
      %v1571 = vmul.f32 %v1557, %v1569
      %v1572 = vmul.f32 %v1558, %v1570
      %1575 = vrot.lane.b32.xlu0 %v1571, 64
      %v1576 = vpop.permute.xlu0 %1575
      %1577 = vrot.lane.b32.xlu0 %v1572, 64
      %v1578 = vpop.permute.xlu0 %1577
      %v1581 = vsel %vm765, %v1405, %v1576
      %v1582 = vsel %vm765, %v1406, %v1578
      %v1583 = vld [vmem:[%s3 + $0x1a0] sm:$0xff]
      %v1584 = vld [vmem:[%s3 + $0x1a8] sm:$0xff]
      %v1585 = vld [vmem:[%s3 + $0x1b0] sm:$0xff]
      %v1586 = vld [vmem:[%s3 + $0x1b8] sm:$0xff]
      %v1587 = vlaneseq
      %v1588 = vshrl.u32 %v1587, 7
      %v1589 = vsub.s32 5, %v1588
      %v1590 = vrot.slane %v276, %v1589
      %v1591 = vsel %vm761, %v262, 0
      %1593 = vmatprep.subr.mxu0 0.0
      %1594 = vmatpush1.msra.mxu0 %v1583
      %1595 = vmatprep.subr.mxu0 0.0
      %1596 = vmatpush1.msra.mxu0 %v1584
      %1597 = vmatprep.subr.mxu0 0.0
      %1598 = vmatpush1.msra.mxu0 %v1585
      %1599 = vmatprep.subr.mxu0 0.0
      %1600 = vmatpush1.msra.mxu0 %v1586
      %1601 = vmatprep.subr.mxu0 0.0
      %1602 = vmatpush1.msra.mxu0 0.0
      %1603 = vmatprep.subr.mxu0 0.0
      %1604 = vmatpush1.msra.mxu0 0.0
      %1605 = vmatprep.subr.mxu0 0.0
      %1606 = vmatpush1.msra.mxu0 0.0
      %1607 = vmatprep.subr.mxu0 0.0
      %1608 = vmatpush1.msra.mxu0 0.0
      %1609 = vmatprep.subr.mxu0 0.0
      %1610 = vmatpush1.msra.mxu0 0.0
      %1611 = vmatprep.subr.mxu0 0.0
      %1612 = vmatpush1.msra.mxu0 0.0
      %1613 = vmatprep.subr.mxu0 0.0
      %1614 = vmatpush1.msra.mxu0 0.0
      %1615 = vmatprep.subr.mxu0 0.0
      %1616 = vmatpush1.msra.mxu0 0.0
      %1617 = vmatprep.subr.mxu0 0.0
      %1618 = vmatpush1.msra.mxu0 0.0
      %1619 = vmatprep.subr.mxu0 0.0
      %1620 = vmatpush1.msra.mxu0 0.0
      %1621 = vmatprep.subr.mxu0 0.0
      %1622 = vmatpush1.msra.mxu0 0.0
      %1623 = vmatprep.subr.mxu0 0.0
      %1624 = vmatpush1.msra.mxu0 0.0
      %1625 = vmatprep.subr.mxu0 0.0
      %1626 = vmatpush1.msra.mxu0 0.0
      %1627 = vmatprep.subr.mxu0 0.0
      %1628 = vmatpush1.msra.mxu0 0.0
      %1629 = vmatprep.subr.mxu0 0.0
      %1630 = vmatpush1.msra.mxu0 0.0
      %1631 = vmatprep.subr.mxu0 0.0
      %1632 = vmatpush1.msra.mxu0 0.0
      %1633 = vmatprep.subr.mxu0 0.0
      %1634 = vmatpush1.msra.mxu0 0.0
      %1635 = vmatprep.subr.mxu0 0.0
      %1636 = vmatpush1.msra.mxu0 0.0
      %1637 = vmatprep.subr.mxu0 0.0
      %1638 = vmatpush1.msra.mxu0 0.0
      %1639 = vmatprep.subr.mxu0 0.0
      %1640 = vmatpush1.msra.mxu0 0.0
      %1641 = vmatprep.subr.mxu0 0.0
      %1642 = vmatpush1.msra.mxu0 0.0
      %1643 = vmatprep.subr.mxu0 0.0
      %1644 = vmatpush1.msra.mxu0 0.0
      %1645 = vmatprep.subr.mxu0 0.0
      %1646 = vmatpush1.msra.mxu0 0.0
      %1647 = vmatprep.subr.mxu0 0.0
      %1648 = vmatpush1.msra.mxu0 0.0
      %1649 = vmatprep.subr.mxu0 0.0
      %1650 = vmatpush1.msra.mxu0 0.0
      %1651 = vmatprep.subr.mxu0 0.0
      %1652 = vmatpush1.msra.mxu0 0.0
      %1653 = vmatprep.subr.mxu0 0.0
      %1654 = vmatpush1.msra.mxu0 0.0
      %1655 = vmatprep.subr.mxu0 0.0
      %1656 = vmatpush1.msra.mxu0 0.0
      %1657 = vmatprep.mubr.f32.mxu0 0.0
      %1658 = vmatmul.mubr.f32.gmra.mrb[0].mxu0 %v1591
      %v1659 = vpop.f32.mrb[0].mxu0
      %v1660 = vadd.f32 %v1590, %v1659
      %v1661 = vpop.f32.mrb[0].mxu0
      %1662 = vdwg.mxu0
      %1663 = vset.pattern.permute.xlu0 2
      %1664 = vperm.xlu0 %1663, %v265
      %v1665 = vpop.permute.xlu0 %1664
      %vm1666 = vcmp.eq.s32.totalorder %v279, %v1665
      %v1667 = vsel %vm1666, 1, 0
      %v1668 = vcvt.s32.f32 %v1667
      %1669 = vset.pattern.permute.xlu0 3
      %1670 = vperm.xlu0 %1669, %v265
      %v1671 = vpop.permute.xlu0 %1670
      %vm1672 = vcmp.eq.s32.totalorder %v279, %v1671
      %v1673 = vsel %vm1672, 1, 0
      %v1674 = vcvt.s32.f32 %v1673
      %vm1675 = vcmask 64512
      %v1677 = vsel %vm1675, %v1674, 0
      %1679 = vmatprep.subr.mxu0 0.0
      %1680 = vmatpush1.msra.mxu0 %v1660
      %1681 = vmatprep.subr.mxu0 0.0
      %1682 = vmatpush1.msra.mxu0 0.0
      %1683 = vmatprep.subr.mxu0 0.0
      %1684 = vmatpush1.msra.mxu0 0.0
      %1685 = vmatprep.subr.mxu0 0.0
      %1686 = vmatpush1.msra.mxu0 0.0
      %1687 = vmatprep.subr.mxu0 0.0
      %1688 = vmatpush1.msra.mxu0 0.0
      %1689 = vmatprep.subr.mxu0 0.0
      %1690 = vmatpush1.msra.mxu0 0.0
      %1691 = vmatprep.subr.mxu0 0.0
      %1692 = vmatpush1.msra.mxu0 0.0
      %1693 = vmatprep.subr.mxu0 0.0
      %1694 = vmatpush1.msra.mxu0 0.0
      %1695 = vmatprep.subr.mxu0 0.0
      %1696 = vmatpush1.msra.mxu0 0.0
      %1697 = vmatprep.subr.mxu0 0.0
      %1698 = vmatpush1.msra.mxu0 0.0
      %1699 = vmatprep.subr.mxu0 0.0
      %1700 = vmatpush1.msra.mxu0 0.0
      %1701 = vmatprep.subr.mxu0 0.0
      %1702 = vmatpush1.msra.mxu0 0.0
      %1703 = vmatprep.subr.mxu0 0.0
      %1704 = vmatpush1.msra.mxu0 0.0
      %1705 = vmatprep.subr.mxu0 0.0
      %1706 = vmatpush1.msra.mxu0 0.0
      %1707 = vmatprep.subr.mxu0 0.0
      %1708 = vmatpush1.msra.mxu0 0.0
      %1709 = vmatprep.subr.mxu0 0.0
      %1710 = vmatpush1.msra.mxu0 0.0
      %1711 = vmatprep.subr.mxu0 0.0
      %1712 = vmatpush1.msra.mxu0 0.0
      %1713 = vmatprep.subr.mxu0 0.0
      %1714 = vmatpush1.msra.mxu0 0.0
      %1715 = vmatprep.subr.mxu0 0.0
      %1716 = vmatpush1.msra.mxu0 0.0
      %1717 = vmatprep.subr.mxu0 0.0
      %1718 = vmatpush1.msra.mxu0 0.0
      %1719 = vmatprep.subr.mxu0 0.0
      %1720 = vmatpush1.msra.mxu0 0.0
      %1721 = vmatprep.subr.mxu0 0.0
      %1722 = vmatpush1.msra.mxu0 0.0
      %1723 = vmatprep.subr.mxu0 0.0
      %1724 = vmatpush1.msra.mxu0 0.0
      %1725 = vmatprep.subr.mxu0 0.0
      %1726 = vmatpush1.msra.mxu0 0.0
      %1727 = vmatprep.subr.mxu0 0.0
      %1728 = vmatpush1.msra.mxu0 0.0
      %1729 = vmatprep.subr.mxu0 0.0
      %1730 = vmatpush1.msra.mxu0 0.0
      %1731 = vmatprep.subr.mxu0 0.0
      %1732 = vmatpush1.msra.mxu0 0.0
      %1733 = vmatprep.subr.mxu0 0.0
      %1734 = vmatpush1.msra.mxu0 0.0
      %1735 = vmatprep.subr.mxu0 0.0
      %1736 = vmatpush1.msra.mxu0 0.0
      %1737 = vmatprep.subr.mxu0 0.0
      %1738 = vmatpush1.msra.mxu0 0.0
      %1739 = vmatprep.subr.mxu0 0.0
      %1740 = vmatpush1.msra.mxu0 0.0
      %1741 = vmatprep.subr.mxu0 0.0
      %1742 = vmatpush1.msra.mxu0 0.0
      %1743 = vmatprep.mubr.f32.mxu0 0.0
      %1744 = vmatmul.mubr.f32.gmra.mrb[0].mxu0 %v1677
      %v1745 = vpop.f32.mrb[0].mxu0
      %v1746 = vadd.f32 0.0, %v1745
      %v1747 = vpop.f32.mrb[0].mxu0
      %1748 = vdwg.mxu0
      %1751 = vrot.lane.b32.xlu0 %v1581, 64
      %v1752 = vpop.permute.xlu0 %1751
      %1753 = vrot.lane.b32.xlu0 %v1582, 64
      %v1754 = vpop.permute.xlu0 %1753
      %v1757 = vsel %vm765, %v862, %v1752
      %v1758 = vsel %vm765, %v867, %v1754
      %v1760 = vsel %vm944, %v1668, 0
      %1762 = vmatprep.subr.mxu0 %v1752
      %1763 = vmatpush1.msra.mxu0 %v1757
      %1764 = vmatprep.subr.mxu0 %v1754
      %1765 = vmatpush1.msra.mxu0 %v1758
      %1766 = vmatprep.subr.mxu0 0.0
      %1767 = vmatpush1.msra.mxu0 0.0
      %1768 = vmatprep.subr.mxu0 0.0
      %1769 = vmatpush1.msra.mxu0 0.0
      %1770 = vmatprep.subr.mxu0 0.0
      %1771 = vmatpush1.msra.mxu0 0.0
      %1772 = vmatprep.subr.mxu0 0.0
      %1773 = vmatpush1.msra.mxu0 0.0
      %1774 = vmatprep.subr.mxu0 0.0
      %1775 = vmatpush1.msra.mxu0 0.0
      %1776 = vmatprep.subr.mxu0 0.0
      %1777 = vmatpush1.msra.mxu0 0.0
      %1778 = vmatprep.subr.mxu0 0.0
      %1779 = vmatpush1.msra.mxu0 0.0
      %1780 = vmatprep.subr.mxu0 0.0
      %1781 = vmatpush1.msra.mxu0 0.0
      %1782 = vmatprep.subr.mxu0 0.0
      %1783 = vmatpush1.msra.mxu0 0.0
      %1784 = vmatprep.subr.mxu0 0.0
      %1785 = vmatpush1.msra.mxu0 0.0
      %1786 = vmatprep.subr.mxu0 0.0
      %1787 = vmatpush1.msra.mxu0 0.0
      %1788 = vmatprep.subr.mxu0 0.0
      %1789 = vmatpush1.msra.mxu0 0.0
      %1790 = vmatprep.subr.mxu0 0.0
      %1791 = vmatpush1.msra.mxu0 0.0
      %1792 = vmatprep.subr.mxu0 0.0
      %1793 = vmatpush1.msra.mxu0 0.0
      %1794 = vmatprep.subr.mxu0 0.0
      %1795 = vmatpush1.msra.mxu0 0.0
      %1796 = vmatprep.subr.mxu0 0.0
      %1797 = vmatpush1.msra.mxu0 0.0
      %1798 = vmatprep.subr.mxu0 0.0
      %1799 = vmatpush1.msra.mxu0 0.0
      %1800 = vmatprep.subr.mxu0 0.0
      %1801 = vmatpush1.msra.mxu0 0.0
      %1802 = vmatprep.subr.mxu0 0.0
      %1803 = vmatpush1.msra.mxu0 0.0
      %1804 = vmatprep.subr.mxu0 0.0
      %1805 = vmatpush1.msra.mxu0 0.0
      %1806 = vmatprep.subr.mxu0 0.0
      %1807 = vmatpush1.msra.mxu0 0.0
      %1808 = vmatprep.subr.mxu0 0.0
      %1809 = vmatpush1.msra.mxu0 0.0
      %1810 = vmatprep.subr.mxu0 0.0
      %1811 = vmatpush1.msra.mxu0 0.0
      %1812 = vmatprep.subr.mxu0 0.0
      %1813 = vmatpush1.msra.mxu0 0.0
      %1814 = vmatprep.subr.mxu0 0.0
      %1815 = vmatpush1.msra.mxu0 0.0
      %1816 = vmatprep.subr.mxu0 0.0
      %1817 = vmatpush1.msra.mxu0 0.0
      %1818 = vmatprep.subr.mxu0 0.0
      %1819 = vmatpush1.msra.mxu0 0.0
      %1820 = vmatprep.subr.mxu0 0.0
      %1821 = vmatpush1.msra.mxu0 0.0
      %1822 = vmatprep.subr.mxu0 0.0
      %1823 = vmatpush1.msra.mxu0 0.0
      %1824 = vmatprep.subr.mxu0 0.0
      %1825 = vmatpush1.msra.mxu0 0.0
      %1826 = vmatprep.mubr.f32.mxu0 0.0
      %1827 = vmatmul.mubr.f32.gmra.mrb[0].mxu0 %v1760
      %v1828 = vpop.f32.mrb[0].mxu0
      %v1829 = vadd.f32 0.0, %v1828
      %v1830 = vpop.f32.mrb[0].mxu0
      %v1831 = vadd.f32 0.0, %v1830
      %1832 = vdwg.mxu0
      %v1833 = vmul.f32 %v1746, %v1829
      %v1834 = vmul.f32 %v1833, %v1833
      %v1835 = vsel %vm765, %v1834, 0.0
      %1836 = vadd.xlane.f32.xlu0 %v1835
      %v1837 = vpop.xlane.xlu0 %1836
      %v1838 = vmax.f32 %v1837, 1e-24
      %v1839 = vrsqrt.pop %v1838
      %v1840 = vmax.f32 %v1746, 0.0
      %v1841 = vmul.f32 %v1833, %v1839
      %1843 = vrot.lane.b32.xlu0 %v1841, 64
      %v1844 = vpop.permute.xlu0 %1843
      %1848 = vrot.lane.b32.xlu0 %v1829, 64
      %v1849 = vpop.permute.xlu0 %1848
      %1850 = vrot.lane.b32.xlu0 %v1831, 64
      %v1851 = vpop.permute.xlu0 %1850
      %v1852 = vsel %vm765, %v1849, %v1851
      %v1854 = vsel %vm765, %v1840, %v1844
      %v1855 = vld [vmem:[%s3 + $0x1c0] sm:$0xff]
      %v1856 = vld [vmem:[%s3 + $0x1c8] sm:$0xff]
      %v1857 = vld [vmem:[%s3 + $0x1d0] sm:$0xff]
      %v1858 = vld [vmem:[%s3 + $0x1d8] sm:$0xff]
      %v1859 = vld [vmem:[%s3 + $0x1e0] sm:$0xff]
      %v1860 = vld [vmem:[%s3 + $0x1e8] sm:$0xff]
      %v1861 = vld [vmem:[%s3 + $0x1f0] sm:$0xff]
      %v1862 = vld [vmem:[%s3 + $0x1f8] sm:$0xff]
      %v1863 = vld [vmem:[%s3 + $0x200] sm:$0xff]
      %v1864 = vld [vmem:[%s3 + $0x208] sm:$0xff]
      %v1865 = vld [vmem:[%s3 + $0x210] sm:$0xff]
      %v1866 = vld [vmem:[%s3 + $0x218] sm:$0xff]
      %v1867 = vld [vmem:[%s3 + $0x220] sm:$0xff]
      %v1868 = vld [vmem:[%s3 + $0x228] sm:$0xff]
      %v1869 = vld [vmem:[%s3 + $0x230] sm:$0xff]
      %v1870 = vld [vmem:[%s3 + $0x238] sm:$0xff]
      %v1871 = vld [vmem:[%s3 + $0x240] sm:$0xff]
      %v1872 = vld [vmem:[%s3 + $0x248] sm:$0xff]
      %v1873 = vld [vmem:[%s3 + $0x250] sm:$0xff]
      %v1874 = vld [vmem:[%s3 + $0x258] sm:$0xff]
      %v1875 = vld [vmem:[%s3 + $0x260] sm:$0xff]
      %v1876 = vld [vmem:[%s3 + $0x268] sm:$0xff]
      %v1877 = vld [vmem:[%s3 + $0x270] sm:$0xff]
      %v1878 = vld [vmem:[%s3 + $0x278] sm:$0xff]
      %v1879 = vld [vmem:[%s3 + $0x280] sm:$0xff]
      %v1880 = vld [vmem:[%s3 + $0x288] sm:$0xff]
      %v1881 = vld [vmem:[%s3 + $0x290] sm:$0xff]
      %v1882 = vld [vmem:[%s3 + $0x298] sm:$0xff]
      %v1883 = vld [vmem:[%s3 + $0x2a0] sm:$0xff]
      %v1884 = vld [vmem:[%s3 + $0x2a8] sm:$0xff]
      %v1885 = vld [vmem:[%s3 + $0x2b0] sm:$0xff]
      %v1886 = vld [vmem:[%s3 + $0x2b8] sm:$0xff]
      %1887 = vmatprep.subr.mxu0 0.0
      %1888 = vmatpush1.msra.mxu0 %v1855
      %1889 = vmatprep.subr.mxu0 0.0
      %1890 = vmatpush1.msra.mxu0 %v1856
      %1891 = vmatprep.subr.mxu0 0.0
      %1892 = vmatpush1.msra.mxu0 %v1857
      %1893 = vmatprep.subr.mxu0 0.0
      %1894 = vmatpush1.msra.mxu0 %v1858
      %1895 = vmatprep.subr.mxu0 0.0
      %1896 = vmatpush1.msra.mxu0 %v1859
      %1897 = vmatprep.subr.mxu0 0.0
      %1898 = vmatpush1.msra.mxu0 %v1860
      %1899 = vmatprep.subr.mxu0 0.0
      %1900 = vmatpush1.msra.mxu0 %v1861
      %1901 = vmatprep.subr.mxu0 0.0
      %1902 = vmatpush1.msra.mxu0 %v1862
      %1903 = vmatprep.subr.mxu0 0.0
      %1904 = vmatpush1.msra.mxu0 %v1863
      %1905 = vmatprep.subr.mxu0 0.0
      %1906 = vmatpush1.msra.mxu0 %v1864
      %1907 = vmatprep.subr.mxu0 0.0
      %1908 = vmatpush1.msra.mxu0 %v1865
      %1909 = vmatprep.subr.mxu0 0.0
      %1910 = vmatpush1.msra.mxu0 %v1866
      %1911 = vmatprep.subr.mxu0 0.0
      %1912 = vmatpush1.msra.mxu0 %v1867
      %1913 = vmatprep.subr.mxu0 0.0
      %1914 = vmatpush1.msra.mxu0 %v1868
      %1915 = vmatprep.subr.mxu0 0.0
      %1916 = vmatpush1.msra.mxu0 %v1869
      %1917 = vmatprep.subr.mxu0 0.0
      %1918 = vmatpush1.msra.mxu0 %v1870
      %1919 = vmatprep.subr.mxu0 0.0
      %1920 = vmatpush1.msra.mxu0 %v1871
      %1921 = vmatprep.subr.mxu0 0.0
      %1922 = vmatpush1.msra.mxu0 %v1872
      %1923 = vmatprep.subr.mxu0 0.0
      %1924 = vmatpush1.msra.mxu0 %v1873
      %1925 = vmatprep.subr.mxu0 0.0
      %1926 = vmatpush1.msra.mxu0 %v1874
      %1927 = vmatprep.subr.mxu0 0.0
      %1928 = vmatpush1.msra.mxu0 %v1875
      %1929 = vmatprep.subr.mxu0 0.0
      %1930 = vmatpush1.msra.mxu0 %v1876
      %1931 = vmatprep.subr.mxu0 0.0
      %1932 = vmatpush1.msra.mxu0 %v1877
      %1933 = vmatprep.subr.mxu0 0.0
      %1934 = vmatpush1.msra.mxu0 %v1878
      %1935 = vmatprep.subr.mxu0 0.0
      %1936 = vmatpush1.msra.mxu0 %v1879
      %1937 = vmatprep.subr.mxu0 0.0
      %1938 = vmatpush1.msra.mxu0 %v1880
      %1939 = vmatprep.subr.mxu0 0.0
      %1940 = vmatpush1.msra.mxu0 %v1881
      %1941 = vmatprep.subr.mxu0 0.0
      %1942 = vmatpush1.msra.mxu0 %v1882
      %1943 = vmatprep.subr.mxu0 0.0
      %1944 = vmatpush1.msra.mxu0 %v1883
      %1945 = vmatprep.subr.mxu0 0.0
      %1946 = vmatpush1.msra.mxu0 %v1884
      %1947 = vmatprep.subr.mxu0 0.0
      %1948 = vmatpush1.msra.mxu0 %v1885
      %1949 = vmatprep.subr.mxu0 0.0
      %1950 = vmatpush1.msra.mxu0 %v1886
      %1951 = vmatprep.mubr.f32.mxu0 %v1852
      %1952 = vmatmul.mubr.f32.gmra.mrb[0].mxu0 %v1854
      %v1953 = vpop.f32.mrb[0].mxu0
      %v1954 = vadd.f32 0.0, %v1953
      %v1955 = vpop.f32.mrb[0].mxu0
      %1956 = vdwg.mxu0
      %v1957 = vlaneseq
      %v1958 = vshrl.u32 %v1957, 7
      %v1959 = vsub.s32 6, %v1958
      %v1960 = vrot.slane %v276, %v1959
      %v1961 = vadd.f32 %v1954, %v1960
      %v1962 = vmax.f32 %v1961, 0.0
      %vm1963 = vcmask 531968
      %v1964 = vsel %vm1963, %v1954, 0.0
      %v1965 = vrot.slane %v1964, 4
      %v1966 = vadd.f32 %v1964, %v1965
      %v1967 = vrot.slane %v1966, 2
      %v1968 = vadd.f32 %v1966, %v1967
      %v1969 = vrot.slane %v1968, 1
      %v1970 = vadd.f32 %v1968, %v1969
      %v1971 = vrcp.pop 8.0
      %v1972 = vmul.f32 %v1970, %v1971
      %v1973 = vadd.f32 %v1972, %v276
      %v1974 = vld [vmem:[%s3 + $0x2c0] sm:$0xff]
      %v1975 = vld [vmem:[%s3 + $0x2c8] sm:$0xff]
      %v1976 = vld [vmem:[%s3 + $0x2d0] sm:$0xff]
      %v1977 = vld [vmem:[%s3 + $0x2d8] sm:$0xff]
      %v1978 = vld [vmem:[%s3 + $0x2e0] sm:$0xff]
      %v1979 = vld [vmem:[%s3 + $0x2e8] sm:$0xff]
      %v1980 = vld [vmem:[%s3 + $0x2f0] sm:$0xff]
      %v1981 = vld [vmem:[%s3 + $0x2f8] sm:$0xff]
      %v1983 = vsel %vm765, %v1962, 0
      %1985 = vmatprep.subr.mxu0 0.0
      %1986 = vmatpush1.msra.mxu0 %v1974
      %1987 = vmatprep.subr.mxu0 0.0
      %1988 = vmatpush1.msra.mxu0 %v1975
      %1989 = vmatprep.subr.mxu0 0.0
      %1990 = vmatpush1.msra.mxu0 %v1976
      %1991 = vmatprep.subr.mxu0 0.0
      %1992 = vmatpush1.msra.mxu0 %v1977
      %1993 = vmatprep.subr.mxu0 0.0
      %1994 = vmatpush1.msra.mxu0 %v1978
      %1995 = vmatprep.subr.mxu0 0.0
      %1996 = vmatpush1.msra.mxu0 %v1979
      %1997 = vmatprep.subr.mxu0 0.0
      %1998 = vmatpush1.msra.mxu0 %v1980
      %1999 = vmatprep.subr.mxu0 0.0
      %2000 = vmatpush1.msra.mxu0 %v1981
      %2001 = vmatprep.subr.mxu0 0.0
      %2002 = vmatpush1.msra.mxu0 0.0
      %2003 = vmatprep.subr.mxu0 0.0
      %2004 = vmatpush1.msra.mxu0 0.0
      %2005 = vmatprep.subr.mxu0 0.0
      %2006 = vmatpush1.msra.mxu0 0.0
      %2007 = vmatprep.subr.mxu0 0.0
      %2008 = vmatpush1.msra.mxu0 0.0
      %2009 = vmatprep.subr.mxu0 0.0
      %2010 = vmatpush1.msra.mxu0 0.0
      %2011 = vmatprep.subr.mxu0 0.0
      %2012 = vmatpush1.msra.mxu0 0.0
      %2013 = vmatprep.subr.mxu0 0.0
      %2014 = vmatpush1.msra.mxu0 0.0
      %2015 = vmatprep.subr.mxu0 0.0
      %2016 = vmatpush1.msra.mxu0 0.0
      %2017 = vmatprep.subr.mxu0 0.0
      %2018 = vmatpush1.msra.mxu0 0.0
      %2019 = vmatprep.subr.mxu0 0.0
      %2020 = vmatpush1.msra.mxu0 0.0
      %2021 = vmatprep.subr.mxu0 0.0
      %2022 = vmatpush1.msra.mxu0 0.0
      %2023 = vmatprep.subr.mxu0 0.0
      %2024 = vmatpush1.msra.mxu0 0.0
      %2025 = vmatprep.subr.mxu0 0.0
      %2026 = vmatpush1.msra.mxu0 0.0
      %2027 = vmatprep.subr.mxu0 0.0
      %2028 = vmatpush1.msra.mxu0 0.0
      %2029 = vmatprep.subr.mxu0 0.0
      %2030 = vmatpush1.msra.mxu0 0.0
      %2031 = vmatprep.subr.mxu0 0.0
      %2032 = vmatpush1.msra.mxu0 0.0
      %2033 = vmatprep.subr.mxu0 0.0
      %2034 = vmatpush1.msra.mxu0 0.0
      %2035 = vmatprep.subr.mxu0 0.0
      %2036 = vmatpush1.msra.mxu0 0.0
      %2037 = vmatprep.subr.mxu0 0.0
      %2038 = vmatpush1.msra.mxu0 0.0
      %2039 = vmatprep.subr.mxu0 0.0
      %2040 = vmatpush1.msra.mxu0 0.0
      %2041 = vmatprep.subr.mxu0 0.0
      %2042 = vmatpush1.msra.mxu0 0.0
      %2043 = vmatprep.subr.mxu0 0.0
      %2044 = vmatpush1.msra.mxu0 0.0
      %2045 = vmatprep.subr.mxu0 0.0
      %2046 = vmatpush1.msra.mxu0 0.0
      %2047 = vmatprep.subr.mxu0 0.0
      %2048 = vmatpush1.msra.mxu0 0.0
      %2049 = vmatprep.mubr.f32.mxu0 0.0
      %2050 = vmatmul.mubr.f32.gmra.mrb[0].mxu0 %v1983
      %v2051 = vpop.f32.mrb[0].mxu0
      %v2052 = vadd.f32 0.0, %v2051
      %v2053 = vpop.f32.mrb[0].mxu0
      %2054 = vdwg.mxu0
      %v2055 = vlaneseq
      %v2056 = vshrl.u32 %v2055, 7
      %v2057 = vsub.s32 7, %v2056
      %v2058 = vrot.slane %v276, %v2057
      %v2059 = vadd.f32 %v2052, %v2058
      %v2060 = vmax.f32 %v2059, 0.0
      %v2061 = vld [vmem:[%s3 + $0x300] sm:$0xff]
      %v2062 = vld [vmem:[%s3 + $0x308] sm:$0xff]
      %v2063 = vld [vmem:[%s3 + $0x310] sm:$0xff]
      %v2064 = vld [vmem:[%s3 + $0x318] sm:$0xff]
      %v2065 = vld [vmem:[%s3 + $0x320] sm:$0xff]
      %v2066 = vld [vmem:[%s3 + $0x328] sm:$0xff]
      %v2067 = vld [vmem:[%s3 + $0x330] sm:$0xff]
      %v2068 = vld [vmem:[%s3 + $0x338] sm:$0xff]
      %v2070 = vsel %vm765, %v2060, 0
      %2072 = vmatprep.subr.mxu0 0.0
      %2073 = vmatpush1.msra.mxu0 %v2061
      %2074 = vmatprep.subr.mxu0 0.0
      %2075 = vmatpush1.msra.mxu0 %v2062
      %2076 = vmatprep.subr.mxu0 0.0
      %2077 = vmatpush1.msra.mxu0 %v2063
      %2078 = vmatprep.subr.mxu0 0.0
      %2079 = vmatpush1.msra.mxu0 %v2064
      %2080 = vmatprep.subr.mxu0 0.0
      %2081 = vmatpush1.msra.mxu0 %v2065
      %2082 = vmatprep.subr.mxu0 0.0
      %2083 = vmatpush1.msra.mxu0 %v2066
      %2084 = vmatprep.subr.mxu0 0.0
      %2085 = vmatpush1.msra.mxu0 %v2067
      %2086 = vmatprep.subr.mxu0 0.0
      %2087 = vmatpush1.msra.mxu0 %v2068
      %2088 = vmatprep.subr.mxu0 0.0
      %2089 = vmatpush1.msra.mxu0 0.0
      %2090 = vmatprep.subr.mxu0 0.0
      %2091 = vmatpush1.msra.mxu0 0.0
      %2092 = vmatprep.subr.mxu0 0.0
      %2093 = vmatpush1.msra.mxu0 0.0
      %2094 = vmatprep.subr.mxu0 0.0
      %2095 = vmatpush1.msra.mxu0 0.0
      %2096 = vmatprep.subr.mxu0 0.0
      %2097 = vmatpush1.msra.mxu0 0.0
      %2098 = vmatprep.subr.mxu0 0.0
      %2099 = vmatpush1.msra.mxu0 0.0
      %2100 = vmatprep.subr.mxu0 0.0
      %2101 = vmatpush1.msra.mxu0 0.0
      %2102 = vmatprep.subr.mxu0 0.0
      %2103 = vmatpush1.msra.mxu0 0.0
      %2104 = vmatprep.subr.mxu0 0.0
      %2105 = vmatpush1.msra.mxu0 0.0
      %2106 = vmatprep.subr.mxu0 0.0
      %2107 = vmatpush1.msra.mxu0 0.0
      %2108 = vmatprep.subr.mxu0 0.0
      %2109 = vmatpush1.msra.mxu0 0.0
      %2110 = vmatprep.subr.mxu0 0.0
      %2111 = vmatpush1.msra.mxu0 0.0
      %2112 = vmatprep.subr.mxu0 0.0
      %2113 = vmatpush1.msra.mxu0 0.0
      %2114 = vmatprep.subr.mxu0 0.0
      %2115 = vmatpush1.msra.mxu0 0.0
      %2116 = vmatprep.subr.mxu0 0.0
      %2117 = vmatpush1.msra.mxu0 0.0
      %2118 = vmatprep.subr.mxu0 0.0
      %2119 = vmatpush1.msra.mxu0 0.0
      %2120 = vmatprep.subr.mxu0 0.0
      %2121 = vmatpush1.msra.mxu0 0.0
      %2122 = vmatprep.subr.mxu0 0.0
      %2123 = vmatpush1.msra.mxu0 0.0
      %2124 = vmatprep.subr.mxu0 0.0
      %2125 = vmatpush1.msra.mxu0 0.0
      %2126 = vmatprep.subr.mxu0 0.0
      %2127 = vmatpush1.msra.mxu0 0.0
      %2128 = vmatprep.subr.mxu0 0.0
      %2129 = vmatpush1.msra.mxu0 0.0
      %2130 = vmatprep.subr.mxu0 0.0
      %2131 = vmatpush1.msra.mxu0 0.0
      %2132 = vmatprep.subr.mxu0 0.0
      %2133 = vmatpush1.msra.mxu0 0.0
      %2134 = vmatprep.subr.mxu0 0.0
      %2135 = vmatpush1.msra.mxu0 0.0
      %2136 = vmatprep.mubr.f32.mxu0 0.0
      %2137 = vmatmul.mubr.f32.gmra.mrb[0].mxu0 %v2070
      %v2138 = vpop.f32.mrb[0].mxu0
      %v2139 = vadd.f32 0.0, %v2138
      %v2140 = vpop.f32.mrb[0].mxu0
      %2141 = vdwg.mxu0
      %v2142 = vlaneseq
      %v2143 = vshrl.u32 %v2142, 7
      %v2144 = vsub.s32 0, %v2143
      %v2145 = vrot.slane %v277, %v2144
      %v2146 = vadd.f32 %v2139, %v2145
      %v2147 = vadd.s32 %v487, 2
      %vm2148 = vcmp.eq.s32.totalorder %v279, %v2147
      %v2149 = vsel %vm2148, 1, 0
      %v2150 = vcvt.s32.f32 %v2149
      %2152 = vset.pattern.permute.xlu0 0
      %2153 = vperm.xlu0 %2152, %v2146
      %v2154 = vpop.permute.xlu0 %2153
      %v2156 = vmul.f32 %v2154, %v2150
      %v2157 = vrot.slane %v2156, 4
      %v2158 = vadd.f32 %v2156, %v2157
      %v2159 = vrot.slane %v2158, 2
      %v2160 = vadd.f32 %v2158, %v2159
      %v2161 = vrot.slane %v2160, 1
      %v2162 = vadd.f32 %v2160, %v2161
      %vm2163 = vcmp.eq.s32.totalorder %v279, 0
      %v2164 = vsel %vm2163, 1, 0
      %v2165 = vcvt.s32.f32 %v2164
      %2167 = vset.pattern.permute.xlu0 64
      %2168 = vperm.xlu0 %2167, %v1973
      %v2169 = vpop.permute.xlu0 %2168
      %v2171 = vmul.f32 %v2169, %v2165
      %v2172 = vadd.f32 %v2162, %v2171
      %vm2173 = vcmp.eq.s32.totalorder %v279, 1
      %v2174 = vsel %vm2173, 1, 0
      %v2175 = vcvt.s32.f32 %v2174
      %2177 = vset.pattern.permute.xlu0 64
      %2178 = vperm.xlu0 %2177, %v1550
      %v2179 = vpop.permute.xlu0 %2178
      %v2181 = vmul.f32 %v2179, %v2175
      %v2183 = vrot.slane %v2181, 2
      %v2185 = vadd.f32 %v2172, %v2183
      %v2186 = vlaneseq
      %v2187 = vshrl.u32 %v2186, 7
      %v2188 = vsub.s32 6, %v2187
      %v2189 = vrot.slane %v2185, %v2188
      %2190 = vst [vmem:[%s259] sm:$0xff] %v2189
      %p2191 = scmp.lt.s32.totalorder %s16, 1
      %s2192 = scalar_select %p2191, %s16, 1
      %s2193 = smul.addr %s2192, 8
      %s2194 = scalar_lea.vmem %s5, %s2193
      // Predicated region
      $region41: #{gfn_forward.1} parent=39 // pred_check
        %p2195 = pneg %p154
      $region42: #{gfn_forward.1} parent=39 // pred_check_branch
        %2197 = sbr.rel (%p2195) target = $region44
      $region43: #{gfn_forward.1} parent=39 // pred_region
        _
      $region44: #{gfn_forward.1} parent=39 // pred_fallthru
        _
    $region40: #{gfn_forward.1} parent=5 // pred_fallthru
      _
    %p2198 = scmp.le.s32.totalorder 2, %s11
    // Predicated region
    $region45: #{gfn_forward.1} parent=5 // pred_check
      %p2199 = pneg %p2198
    $region46: #{gfn_forward.1} parent=5 // pred_check_branch
      %2201 = sbr.rel (%p2199) target = $region48
    $region47: #{gfn_forward.1} parent=5 // pred_region
      %s2202 = ssub.s32 %s11, 2
      // Predicated region
      $region49: #{gfn_forward.1} parent=47 // pred_check
        %p2203 = pneg %p160
      $region50: #{gfn_forward.1} parent=47 // pred_check_branch
        %2205 = sbr.rel (%p2203) target = $region52
      $region51: #{gfn_forward.1} parent=47 // pred_region
        %p2206 = scmp.lt.s32.totalorder %s17, 1
        %s2207 = scalar_select %p2206, %s17, 1
        %s2208 = smul.addr %s2207, 8
        %s2209 = scalar_lea.vmem %s5, %s2208
      $region52: #{gfn_forward.1} parent=47 // pred_fallthru
        _
    $region48: #{gfn_forward.1} parent=5 // pred_fallthru
      _
  $region6: #{gfn_forward.1} parent=0 // loop_footer
    %s15 = sadd.s32 1, %s11
  $region7: #{gfn_forward.1} parent=0 // loop_footer_branch
    %10 = sbr.rel target = $region3
  $region8: #{gfn_forward.1} parent=0 // loop_exit
    _

</llo_original>
